<compile_context>
chip_gen: v7x
topology: tpu7x:2x2x1
jax: 0.10.0
libtpu: 0.0.40
codegen_flags: <defaults>
</compile_context>

<pallas_src>
import functools
import numpy as np
import jax
import jax.numpy as jnp
from jax.experimental import pallas as pl
from jax.experimental.pallas import tpu as pltpu


# (C_in, C_out, K, pad) per layer — matches CnnDecoder defaults (all stride 1).
_LAYER_CFG = (
    (64, 32, 3, 3),
    (32, 16, 3, 3),
    (16, 8, 3, 3),
    (8, 1, 3, 3),
)


def _out_len(l_in, k, pad):
    return (l_in - 1) - 2 * pad + k          # stride=1, output_padding=0


def _seq_lens(l0):
    lens = [l0]
    for (_ci, _co, k, pad) in _LAYER_CFG:
        lens.append(_out_len(lens[-1], k, pad))
    return tuple(lens)


# ------------------------------ fused kernel --------------------------------

def _fused_decoder_kernel(x_ref, w1_ref, b1_ref, w2_ref, b2_ref, w3_ref, b3_ref,
                          w4_ref, b4_ref, o_ref, *, lens, cfg):
    """All four ConvTranspose1d(+ReLU) layers for one batch tile, fully in VMEM.

    x_ref : (TB, 64, L0)  channels-first input tile (no host-side transpose)
    wN_ref: (K, C_out, C_in) bf16 tap slabs; layer 4 is (K, C_in, 1) f32.
    bN_ref: (C_out, 1) f32; layer 4 is (1, 1) f32.
    o_ref : (TB, 1, L4)   lane-dense final store (L on lanes).
    """
    L0, L1, L2, L3, L4 = lens
    (_c1, _o1, k1, p1), (_c2, _o2, k2, p2), (_c3, _o3, k3, p3), (_c4, _o4, k4, p4) = cfg
    tb = x_ref.shape[0]

    def conv_t(act, w_ref, b_ref, l_out, k, pad, relu):
        # Shift-accumulated batched matmuls: one whole-tensor lane slice and one
        # MXU push per tap (no per-batch loop, no K*C_in im2col concat slab).
        c_out, c_in = w_ref.shape[1], w_ref.shape[2]
        acc = None
        for j in range(k):
            tap = act[:, :, pad - j:pad - j + l_out]               # (TB, C_in, l_out) bf16
            w_b = jnp.broadcast_to(w_ref[j], (tb, c_out, c_in))    # (TB, C_out, C_in) bf16
            part = jnp.einsum('boc,bcl->bol', w_b, tap,
                              preferred_element_type=jnp.float32)  # f32 accumulate
            acc = part if acc is None else acc + part
        acc = acc + b_ref[...]                                     # (C_out,1) f32 bias
        if relu:
            acc = jnp.maximum(acc, 0.0)                            # f32 on the VPU
        return acc

    x = x_ref[...].astype(jnp.bfloat16)                            # (TB, 64, L0)

    y1 = conv_t(x, w1_ref, b1_ref, L1, k1, p1, True).astype(jnp.bfloat16)   # (TB, 32, L1)
    y2 = conv_t(y1, w2_ref, b2_ref, L2, k2, p2, True).astype(jnp.bfloat16)  # (TB, 16, L2)
    y3 = conv_t(y2, w3_ref, b3_ref, L3, k3, p3, True)                        # (TB,  8, L3) f32

    # ---- layer 4: 8 -> 1, no ReLU --------------------------------------------
    # C_out == 1: broadcast-multiply + sublane reduction (f32) instead of an
    # M=1 matmul; result and store are lane-dense (TB, 1, L4).
    y4 = None
    for j in range(k4):
        tap = y3[:, :, p4 - j:p4 - j + L4]                         # (TB, 8, L4) f32
        part = jnp.sum(tap * w4_ref[j], axis=1, keepdims=True)     # (TB, 1, L4)
        y4 = part if y4 is None else y4 + part
    o_ref[...] = (y4 + b4_ref[...]).astype(o_ref.dtype)


# ------------------------------ host wrappers --------------------------------

def pack_params(torch_params):
    """One-time re-layout of PyTorch-style params for the fused kernel.

    torch_params: list of (w (C_in, C_out, K), b (C_out,)).
    Layers 1-3: w -> (K, C_out, C_in) bf16 (MXU-native), b -> (C_out, 1) f32.
    Layer 4   : w -> (K, C_in, 1)  f32 (VPU epilogue),  b -> (1, 1) f32.
    """
    packed = []
    n = len(torch_params)
    for idx, (w, b) in enumerate(torch_params):
        c_in, c_out, k = w.shape
        if idx == n - 1:
            assert c_out == 1
            packed += [jnp.transpose(w, (2, 0, 1)).astype(jnp.float32),   # (K, C_in, 1)
                       b.reshape(1, 1).astype(jnp.float32)]
        else:
            packed += [jnp.transpose(w, (2, 1, 0)).astype(jnp.bfloat16),  # (K, C_out, C_in)
                       b.reshape(c_out, 1).astype(jnp.float32)]
    return tuple(packed)


def _pick_batch_tile(batch, l0, budget_bytes=12 << 20, bytes_per_token=1536):
    """Largest batch tile (divisor of B) whose resident activations stay within a
    budget derived from v7x's 64 MiB VMEM (leaves headroom for double-buffered
    input/output blocks); also safe on v5e/v6e."""
    max_rows = max(1, budget_bytes // max(1, l0 * bytes_per_token))
    tb = max(1, min(batch, max_rows))
    while batch % tb:
        tb -= 1
    return tb


def cnn_decoder_forward(x_ncl, packed_params, *, batch_tile=None):
    """x_ncl: (B, 64, L) float32 (PyTorch NCL). Returns (B, 1, L - 16) float32."""
    B, C0, L0 = x_ncl.shape
    assert C0 == _LAYER_CFG[0][0], (C0, _LAYER_CFG[0][0])
    for (_ci, _co, k, pad) in _LAYER_CFG:
        # pad >= K-1 makes every gathered index t+pad-j in-bounds (no zero pad).
        assert pad >= k - 1
    lens = _seq_lens(L0)
    for l in lens[1:]:
        assert l >= 1, "sequence too short for this decoder"
    L_out = lens[-1]

    TB = batch_tile if batch_tile is not None else _pick_batch_tile(B, L0)
    TB = max(1, min(int(TB), B))
    while B % TB:                              # keep every grid block full
        TB -= 1

    kernel = functools.partial(_fused_decoder_kernel, lens=lens, cfg=_LAYER_CFG)

    in_specs = [pl.BlockSpec((TB, C0, L0), lambda i: (i, 0, 0))]
    n_layers = len(_LAYER_CFG)
    for idx, (c_in, c_out, k, _pad) in enumerate(_LAYER_CFG):
        if idx == n_layers - 1:
            in_specs.append(pl.BlockSpec((k, c_in, 1), lambda i: (0, 0, 0)))
            in_specs.append(pl.BlockSpec((1, 1), lambda i: (0, 0)))
        else:
            in_specs.append(pl.BlockSpec((k, c_out, c_in), lambda i: (0, 0, 0)))
            in_specs.append(pl.BlockSpec((c_out, 1), lambda i: (0, 0)))

    flops = 2 * B * sum(l * k * ci * co
                        for l, (ci, co, k, _p) in zip(lens[1:], _LAYER_CFG))
    bytes_accessed = (x_ncl.size * x_ncl.dtype.itemsize + B * L_out * 4
                      + sum(int(p.size) * p.dtype.itemsize for p in packed_params))

    return pl.pallas_call(
        kernel,
        out_shape=jax.ShapeDtypeStruct((B, 1, L_out), jnp.float32),
        grid=(B // TB,),
        in_specs=in_specs,
        out_specs=pl.BlockSpec((TB, 1, L_out), lambda i: (i, 0, 0)),
        compiler_params=pltpu.CompilerParams(
            dimension_semantics=("parallel",),        # v7x: batch tiles across both TCs
            vmem_limit_bytes=32 * 1024 * 1024),       # explicit (v5e default is 16 MiB)
        cost_estimate=pl.CostEstimate(flops=flops, transcendentals=0,
                                      bytes_accessed=bytes_accessed),
    )(x_ncl, *packed_params)


# ----------------------------- parameter setup ------------------------------

def init_params(key):
    """PyTorch-layout params: list of (w (C_in, C_out, K), b (C_out,))."""
    params = []
    for (c_in, c_out, k, _pad) in _LAYER_CFG:
        key, kw, kb = jax.random.split(key, 3)
        bound = 1.0 / np.sqrt(c_in * k)
        w = jax.random.uniform(kw, (c_in, c_out, k), jnp.float32, -bound, bound)
        b = jax.random.uniform(kb, (c_out,), jnp.float32, -bound, bound)
        params.append((w, b))
    return params


# --------------------------- numpy reference check --------------------------

def _ref_conv_transpose1d(x, w, b, pad):
    """Scatter-form ConvTranspose1d (stride=1). x: (B, C_in, L)."""
    B, C_in, L = x.shape
    _, C_out, K = w.shape
    L_full = L - 1 + K
    y = np.zeros((B, C_out, L_full), np.float32)
    for n in range(L):
        for j in range(K):
            y[:, :, n + j] += np.einsum('bi,io->bo', x[:, :, n], w[:, :, j])
    return y[:, :, pad:L_full - pad] + b[None, :, None]


def _ref_forward(x_ncl, torch_params):
    x = np.asarray(x_ncl, np.float32)
    n = len(torch_params)
    for idx, ((w, b), (_ci, _co, _k, pad)) in enumerate(zip(torch_params, _LAYER_CFG)):
        x = _ref_conv_transpose1d(x, np.asarray(w), np.asarray(b), pad)
        if idx < n - 1:
            x = np.maximum(x, 0.0)
    return x


if __name__ == "__main__":
    key = jax.random.PRNGKey(0)
    key, kx = jax.random.split(key)
    B, C_IN, L = 4, 64, 32                                  # output will be (4, 1, 16)
    x = jax.random.normal(kx, (B, C_IN, L), jnp.float32)

    torch_params = init_params(key)
    packed = pack_params(torch_params)                      # one-time re-layout (bf16)

    ref = _ref_forward(np.asarray(x), torch_params)

    # Multi-step batch-tiled grid (grid=(2,), "parallel" batch axis).
    fwd_tiled = jax.jit(functools.partial(cnn_decoder_forward, batch_tile=2))
    out = jax.block_until_ready(fwd_tiled(x, packed))
    assert out.shape == ref.shape == (B, 1, L - 16), (out.shape, ref.shape)
    np.testing.assert_allclose(np.asarray(out), ref, rtol=5e-2, atol=2e-2)

    # Auto tile selection (single block here).
    out2 = jax.block_until_ready(jax.jit(cnn_decoder_forward)(x, packed))
    np.testing.assert_allclose(np.asarray(out2), ref, rtol=5e-2, atol=2e-2)

    print("KERNEL_OK")
</pallas_src>

<mosaic_0001>
module attributes {stable_mosaic.version = 11 : i64} {
  func.func @_fused_decoder_kernel(%arg0: i32, %arg1: memref<2x64x32xf32, #tpu.memory_space<vmem>>, %arg2: memref<3x32x64xbf16, #tpu.memory_space<vmem>>, %arg3: memref<32x1xf32, #tpu.memory_space<vmem>>, %arg4: memref<3x16x32xbf16, #tpu.memory_space<vmem>>, %arg5: memref<16x1xf32, #tpu.memory_space<vmem>>, %arg6: memref<3x8x16xbf16, #tpu.memory_space<vmem>>, %arg7: memref<8x1xf32, #tpu.memory_space<vmem>>, %arg8: memref<3x8x1xf32, #tpu.memory_space<vmem>>, %arg9: memref<1x1xf32, #tpu.memory_space<vmem>>, %arg10: memref<2x1x16xf32, #tpu.memory_space<vmem>>) attributes {dimension_semantics = [#tpu.dimension_semantics<parallel>], iteration_bounds = array<i64: 2>, scalar_prefetch = 0 : i64, scratch_operands = 0 : i64, tpu.core_type = #tpu.core_type<tc>, window_params = [{transform_indices = @transform_0, window_bounds = array<i64: 2, 64, 32>}, {pipeline_mode = #tpu.pipeline_mode<synchronous>, transform_indices = @transform_1, window_bounds = array<i64: 3, 32, 64>}, {pipeline_mode = #tpu.pipeline_mode<synchronous>, transform_indices = @transform_2, window_bounds = array<i64: 32, 1>}, {pipeline_mode = #tpu.pipeline_mode<synchronous>, transform_indices = @transform_3, window_bounds = array<i64: 3, 16, 32>}, {pipeline_mode = #tpu.pipeline_mode<synchronous>, transform_indices = @transform_4, window_bounds = array<i64: 16, 1>}, {pipeline_mode = #tpu.pipeline_mode<synchronous>, transform_indices = @transform_5, window_bounds = array<i64: 3, 8, 16>}, {pipeline_mode = #tpu.pipeline_mode<synchronous>, transform_indices = @transform_6, window_bounds = array<i64: 8, 1>}, {pipeline_mode = #tpu.pipeline_mode<synchronous>, transform_indices = @transform_7, window_bounds = array<i64: 3, 8, 1>}, {pipeline_mode = #tpu.pipeline_mode<synchronous>, transform_indices = @transform_8, window_bounds = array<i64: 1, 1>}, {transform_indices = @transform_9, window_bounds = array<i64: 2, 1, 16>}]} {
    %c0 = arith.constant 0 : index
    %c0_0 = arith.constant 0 : index
    %c0_1 = arith.constant 0 : index
    %0 = vector.load %arg1[%c0, %c0_0, %c0_1] : memref<2x64x32xf32, #tpu.memory_space<vmem>>, vector<2x64x32xf32>
    %1 = arith.truncf %0 : vector<2x64x32xf32> to vector<2x64x32xbf16>
    %2 = vector.extract_strided_slice %1 {offsets = [0, 0, 3], sizes = [2, 64, 28], strides = [1, 1, 1]} : vector<2x64x32xbf16> to vector<2x64x28xbf16>
    %c0_2 = arith.constant 0 : index
    %c0_3 = arith.constant 0 : index
    %c0_4 = arith.constant 0 : index
    %3 = vector.load %arg2[%c0_2, %c0_3, %c0_4] : memref<3x32x64xbf16, #tpu.memory_space<vmem>>, vector<1x32x64xbf16>
    %4 = vector.shape_cast %3 : vector<1x32x64xbf16> to vector<32x64xbf16>
    %5 = vector.shape_cast %4 : vector<32x64xbf16> to vector<1x32x64xbf16>
    %6 = vector.broadcast %5 : vector<1x32x64xbf16> to vector<2x32x64xbf16>
    "tpu.trace_start"() <{level = 10 : i32, message = "boc,bcl->bol"}> : () -> ()
    %cst = arith.constant dense<0.000000e+00> : vector<2x32x28xf32>
    %7 = tpu.matmul %6, %2, %cst {dimension_numbers = #tpu.dot_dimension_numbers<[2], [1], [1], [2], [0, 0, 0, 1, 1, 2], [0], [0]>} : vector<2x32x64xbf16>, vector<2x64x28xbf16>, vector<2x32x28xf32> -> vector<2x32x28xf32>
    "tpu.trace_stop"() : () -> ()
    %8 = vector.extract_strided_slice %1 {offsets = [0, 0, 2], sizes = [2, 64, 28], strides = [1, 1, 1]} : vector<2x64x32xbf16> to vector<2x64x28xbf16>
    %c1 = arith.constant 1 : index
    %c0_5 = arith.constant 0 : index
    %c0_6 = arith.constant 0 : index
    %9 = vector.load %arg2[%c1, %c0_5, %c0_6] : memref<3x32x64xbf16, #tpu.memory_space<vmem>>, vector<1x32x64xbf16>
    %10 = vector.shape_cast %9 : vector<1x32x64xbf16> to vector<32x64xbf16>
    %11 = vector.shape_cast %10 : vector<32x64xbf16> to vector<1x32x64xbf16>
    %12 = vector.broadcast %11 : vector<1x32x64xbf16> to vector<2x32x64xbf16>
    "tpu.trace_start"() <{level = 10 : i32, message = "boc,bcl->bol"}> : () -> ()
    %cst_7 = arith.constant dense<0.000000e+00> : vector<2x32x28xf32>
    %13 = tpu.matmul %12, %8, %cst_7 {dimension_numbers = #tpu.dot_dimension_numbers<[2], [1], [1], [2], [0, 0, 0, 1, 1, 2], [0], [0]>} : vector<2x32x64xbf16>, vector<2x64x28xbf16>, vector<2x32x28xf32> -> vector<2x32x28xf32>
    "tpu.trace_stop"() : () -> ()
    %14 = arith.addf %7, %13 : vector<2x32x28xf32>
    %15 = vector.extract_strided_slice %1 {offsets = [0, 0, 1], sizes = [2, 64, 28], strides = [1, 1, 1]} : vector<2x64x32xbf16> to vector<2x64x28xbf16>
    %c2 = arith.constant 2 : index
    %c0_8 = arith.constant 0 : index
    %c0_9 = arith.constant 0 : index
    %16 = vector.load %arg2[%c2, %c0_8, %c0_9] : memref<3x32x64xbf16, #tpu.memory_space<vmem>>, vector<1x32x64xbf16>
    %17 = vector.shape_cast %16 : vector<1x32x64xbf16> to vector<32x64xbf16>
    %18 = vector.shape_cast %17 : vector<32x64xbf16> to vector<1x32x64xbf16>
    %19 = vector.broadcast %18 : vector<1x32x64xbf16> to vector<2x32x64xbf16>
    "tpu.trace_start"() <{level = 10 : i32, message = "boc,bcl->bol"}> : () -> ()
    %cst_10 = arith.constant dense<0.000000e+00> : vector<2x32x28xf32>
    %20 = tpu.matmul %19, %15, %cst_10 {dimension_numbers = #tpu.dot_dimension_numbers<[2], [1], [1], [2], [0, 0, 0, 1, 1, 2], [0], [0]>} : vector<2x32x64xbf16>, vector<2x64x28xbf16>, vector<2x32x28xf32> -> vector<2x32x28xf32>
    "tpu.trace_stop"() : () -> ()
    %21 = arith.addf %14, %20 : vector<2x32x28xf32>
    %c0_11 = arith.constant 0 : index
    %c0_12 = arith.constant 0 : index
    %22 = vector.load %arg3[%c0_11, %c0_12] : memref<32x1xf32, #tpu.memory_space<vmem>>, vector<32x1xf32>
    %23 = vector.shape_cast %22 : vector<32x1xf32> to vector<1x32x1xf32>
    %24 = vector.broadcast %23 : vector<1x32x1xf32> to vector<2x32x28xf32>
    %25 = arith.addf %21, %24 : vector<2x32x28xf32>
    %cst_13 = arith.constant 0.000000e+00 : f32
    %26 = vector.broadcast %cst_13 : f32 to vector<2x32x28xf32>
    %27 = arith.maximumf %25, %26 : vector<2x32x28xf32>
    %28 = arith.truncf %27 : vector<2x32x28xf32> to vector<2x32x28xbf16>
    %29 = vector.extract_strided_slice %28 {offsets = [0, 0, 3], sizes = [2, 32, 24], strides = [1, 1, 1]} : vector<2x32x28xbf16> to vector<2x32x24xbf16>
    %c0_14 = arith.constant 0 : index
    %c0_15 = arith.constant 0 : index
    %c0_16 = arith.constant 0 : index
    %30 = vector.load %arg4[%c0_14, %c0_15, %c0_16] : memref<3x16x32xbf16, #tpu.memory_space<vmem>>, vector<1x16x32xbf16>
    %31 = vector.shape_cast %30 : vector<1x16x32xbf16> to vector<16x32xbf16>
    %32 = vector.shape_cast %31 : vector<16x32xbf16> to vector<1x16x32xbf16>
    %33 = vector.broadcast %32 : vector<1x16x32xbf16> to vector<2x16x32xbf16>
    "tpu.trace_start"() <{level = 10 : i32, message = "boc,bcl->bol"}> : () -> ()
    %cst_17 = arith.constant dense<0.000000e+00> : vector<2x16x24xf32>
    %34 = tpu.matmul %33, %29, %cst_17 {dimension_numbers = #tpu.dot_dimension_numbers<[2], [1], [1], [2], [0, 0, 0, 1, 1, 2], [0], [0]>} : vector<2x16x32xbf16>, vector<2x32x24xbf16>, vector<2x16x24xf32> -> vector<2x16x24xf32>
    "tpu.trace_stop"() : () -> ()
    %35 = vector.extract_strided_slice %28 {offsets = [0, 0, 2], sizes = [2, 32, 24], strides = [1, 1, 1]} : vector<2x32x28xbf16> to vector<2x32x24xbf16>
    %c1_18 = arith.constant 1 : index
    %c0_19 = arith.constant 0 : index
    %c0_20 = arith.constant 0 : index
    %36 = vector.load %arg4[%c1_18, %c0_19, %c0_20] : memref<3x16x32xbf16, #tpu.memory_space<vmem>>, vector<1x16x32xbf16>
    %37 = vector.shape_cast %36 : vector<1x16x32xbf16> to vector<16x32xbf16>
    %38 = vector.shape_cast %37 : vector<16x32xbf16> to vector<1x16x32xbf16>
    %39 = vector.broadcast %38 : vector<1x16x32xbf16> to vector<2x16x32xbf16>
    "tpu.trace_start"() <{level = 10 : i32, message = "boc,bcl->bol"}> : () -> ()
    %cst_21 = arith.constant dense<0.000000e+00> : vector<2x16x24xf32>
    %40 = tpu.matmul %39, %35, %cst_21 {dimension_numbers = #tpu.dot_dimension_numbers<[2], [1], [1], [2], [0, 0, 0, 1, 1, 2], [0], [0]>} : vector<2x16x32xbf16>, vector<2x32x24xbf16>, vector<2x16x24xf32> -> vector<2x16x24xf32>
    "tpu.trace_stop"() : () -> ()
    %41 = arith.addf %34, %40 : vector<2x16x24xf32>
    %42 = vector.extract_strided_slice %28 {offsets = [0, 0, 1], sizes = [2, 32, 24], strides = [1, 1, 1]} : vector<2x32x28xbf16> to vector<2x32x24xbf16>
    %c2_22 = arith.constant 2 : index
    %c0_23 = arith.constant 0 : index
    %c0_24 = arith.constant 0 : index
    %43 = vector.load %arg4[%c2_22, %c0_23, %c0_24] : memref<3x16x32xbf16, #tpu.memory_space<vmem>>, vector<1x16x32xbf16>
    %44 = vector.shape_cast %43 : vector<1x16x32xbf16> to vector<16x32xbf16>
    %45 = vector.shape_cast %44 : vector<16x32xbf16> to vector<1x16x32xbf16>
    %46 = vector.broadcast %45 : vector<1x16x32xbf16> to vector<2x16x32xbf16>
    "tpu.trace_start"() <{level = 10 : i32, message = "boc,bcl->bol"}> : () -> ()
    %cst_25 = arith.constant dense<0.000000e+00> : vector<2x16x24xf32>
    %47 = tpu.matmul %46, %42, %cst_25 {dimension_numbers = #tpu.dot_dimension_numbers<[2], [1], [1], [2], [0, 0, 0, 1, 1, 2], [0], [0]>} : vector<2x16x32xbf16>, vector<2x32x24xbf16>, vector<2x16x24xf32> -> vector<2x16x24xf32>
    "tpu.trace_stop"() : () -> ()
    %48 = arith.addf %41, %47 : vector<2x16x24xf32>
    %c0_26 = arith.constant 0 : index
    %c0_27 = arith.constant 0 : index
    %49 = vector.load %arg5[%c0_26, %c0_27] : memref<16x1xf32, #tpu.memory_space<vmem>>, vector<16x1xf32>
    %50 = vector.shape_cast %49 : vector<16x1xf32> to vector<1x16x1xf32>
    %51 = vector.broadcast %50 : vector<1x16x1xf32> to vector<2x16x24xf32>
    %52 = arith.addf %48, %51 : vector<2x16x24xf32>
    %cst_28 = arith.constant 0.000000e+00 : f32
    %53 = vector.broadcast %cst_28 : f32 to vector<2x16x24xf32>
    %54 = arith.maximumf %52, %53 : vector<2x16x24xf32>
    %55 = arith.truncf %54 : vector<2x16x24xf32> to vector<2x16x24xbf16>
    %56 = vector.extract_strided_slice %55 {offsets = [0, 0, 3], sizes = [2, 16, 20], strides = [1, 1, 1]} : vector<2x16x24xbf16> to vector<2x16x20xbf16>
    %c0_29 = arith.constant 0 : index
    %c0_30 = arith.constant 0 : index
    %c0_31 = arith.constant 0 : index
    %57 = vector.load %arg6[%c0_29, %c0_30, %c0_31] : memref<3x8x16xbf16, #tpu.memory_space<vmem>>, vector<1x8x16xbf16>
    %58 = vector.shape_cast %57 : vector<1x8x16xbf16> to vector<8x16xbf16>
    %59 = vector.shape_cast %58 : vector<8x16xbf16> to vector<1x8x16xbf16>
    %60 = vector.broadcast %59 : vector<1x8x16xbf16> to vector<2x8x16xbf16>
    "tpu.trace_start"() <{level = 10 : i32, message = "boc,bcl->bol"}> : () -> ()
    %cst_32 = arith.constant dense<0.000000e+00> : vector<2x8x20xf32>
    %61 = tpu.matmul %60, %56, %cst_32 {dimension_numbers = #tpu.dot_dimension_numbers<[2], [1], [1], [2], [0, 0, 0, 1, 1, 2], [0], [0]>} : vector<2x8x16xbf16>, vector<2x16x20xbf16>, vector<2x8x20xf32> -> vector<2x8x20xf32>
    "tpu.trace_stop"() : () -> ()
    %62 = vector.extract_strided_slice %55 {offsets = [0, 0, 2], sizes = [2, 16, 20], strides = [1, 1, 1]} : vector<2x16x24xbf16> to vector<2x16x20xbf16>
    %c1_33 = arith.constant 1 : index
    %c0_34 = arith.constant 0 : index
    %c0_35 = arith.constant 0 : index
    %63 = vector.load %arg6[%c1_33, %c0_34, %c0_35] : memref<3x8x16xbf16, #tpu.memory_space<vmem>>, vector<1x8x16xbf16>
    %64 = vector.shape_cast %63 : vector<1x8x16xbf16> to vector<8x16xbf16>
    %65 = vector.shape_cast %64 : vector<8x16xbf16> to vector<1x8x16xbf16>
    %66 = vector.broadcast %65 : vector<1x8x16xbf16> to vector<2x8x16xbf16>
    "tpu.trace_start"() <{level = 10 : i32, message = "boc,bcl->bol"}> : () -> ()
    %cst_36 = arith.constant dense<0.000000e+00> : vector<2x8x20xf32>
    %67 = tpu.matmul %66, %62, %cst_36 {dimension_numbers = #tpu.dot_dimension_numbers<[2], [1], [1], [2], [0, 0, 0, 1, 1, 2], [0], [0]>} : vector<2x8x16xbf16>, vector<2x16x20xbf16>, vector<2x8x20xf32> -> vector<2x8x20xf32>
    "tpu.trace_stop"() : () -> ()
    %68 = arith.addf %61, %67 : vector<2x8x20xf32>
    %69 = vector.extract_strided_slice %55 {offsets = [0, 0, 1], sizes = [2, 16, 20], strides = [1, 1, 1]} : vector<2x16x24xbf16> to vector<2x16x20xbf16>
    %c2_37 = arith.constant 2 : index
    %c0_38 = arith.constant 0 : index
    %c0_39 = arith.constant 0 : index
    %70 = vector.load %arg6[%c2_37, %c0_38, %c0_39] : memref<3x8x16xbf16, #tpu.memory_space<vmem>>, vector<1x8x16xbf16>
    %71 = vector.shape_cast %70 : vector<1x8x16xbf16> to vector<8x16xbf16>
    %72 = vector.shape_cast %71 : vector<8x16xbf16> to vector<1x8x16xbf16>
    %73 = vector.broadcast %72 : vector<1x8x16xbf16> to vector<2x8x16xbf16>
    "tpu.trace_start"() <{level = 10 : i32, message = "boc,bcl->bol"}> : () -> ()
    %cst_40 = arith.constant dense<0.000000e+00> : vector<2x8x20xf32>
    %74 = tpu.matmul %73, %69, %cst_40 {dimension_numbers = #tpu.dot_dimension_numbers<[2], [1], [1], [2], [0, 0, 0, 1, 1, 2], [0], [0]>} : vector<2x8x16xbf16>, vector<2x16x20xbf16>, vector<2x8x20xf32> -> vector<2x8x20xf32>
    "tpu.trace_stop"() : () -> ()
    %75 = arith.addf %68, %74 : vector<2x8x20xf32>
    %c0_41 = arith.constant 0 : index
    %c0_42 = arith.constant 0 : index
    %76 = vector.load %arg7[%c0_41, %c0_42] : memref<8x1xf32, #tpu.memory_space<vmem>>, vector<8x1xf32>
    %77 = vector.shape_cast %76 : vector<8x1xf32> to vector<1x8x1xf32>
    %78 = vector.broadcast %77 : vector<1x8x1xf32> to vector<2x8x20xf32>
    %79 = arith.addf %75, %78 : vector<2x8x20xf32>
    %cst_43 = arith.constant 0.000000e+00 : f32
    %80 = vector.broadcast %cst_43 : f32 to vector<2x8x20xf32>
    %81 = arith.maximumf %79, %80 : vector<2x8x20xf32>
    %82 = vector.extract_strided_slice %81 {offsets = [0, 0, 3], sizes = [2, 8, 16], strides = [1, 1, 1]} : vector<2x8x20xf32> to vector<2x8x16xf32>
    %c0_44 = arith.constant 0 : index
    %c0_45 = arith.constant 0 : index
    %c0_46 = arith.constant 0 : index
    %83 = vector.load %arg8[%c0_44, %c0_45, %c0_46] : memref<3x8x1xf32, #tpu.memory_space<vmem>>, vector<1x8x1xf32>
    %84 = vector.shape_cast %83 : vector<1x8x1xf32> to vector<8x1xf32>
    %85 = vector.shape_cast %84 : vector<8x1xf32> to vector<1x8x1xf32>
    %86 = vector.broadcast %85 : vector<1x8x1xf32> to vector<2x8x16xf32>
    %87 = arith.mulf %82, %86 : vector<2x8x16xf32>
    %cst_47 = arith.constant dense<0.000000e+00> : vector<2x16xf32>
    %88 = vector.multi_reduction <add>, %87, %cst_47 [1] : vector<2x8x16xf32> to vector<2x16xf32>
    %89 = vector.shape_cast %88 : vector<2x16xf32> to vector<2x1x16xf32>
    %90 = vector.extract_strided_slice %81 {offsets = [0, 0, 2], sizes = [2, 8, 16], strides = [1, 1, 1]} : vector<2x8x20xf32> to vector<2x8x16xf32>
    %c1_48 = arith.constant 1 : index
    %c0_49 = arith.constant 0 : index
    %c0_50 = arith.constant 0 : index
    %91 = vector.load %arg8[%c1_48, %c0_49, %c0_50] : memref<3x8x1xf32, #tpu.memory_space<vmem>>, vector<1x8x1xf32>
    %92 = vector.shape_cast %91 : vector<1x8x1xf32> to vector<8x1xf32>
    %93 = vector.shape_cast %92 : vector<8x1xf32> to vector<1x8x1xf32>
    %94 = vector.broadcast %93 : vector<1x8x1xf32> to vector<2x8x16xf32>
    %95 = arith.mulf %90, %94 : vector<2x8x16xf32>
    %cst_51 = arith.constant dense<0.000000e+00> : vector<2x16xf32>
    %96 = vector.multi_reduction <add>, %95, %cst_51 [1] : vector<2x8x16xf32> to vector<2x16xf32>
    %97 = vector.shape_cast %96 : vector<2x16xf32> to vector<2x1x16xf32>
    %98 = arith.addf %89, %97 : vector<2x1x16xf32>
    %99 = vector.extract_strided_slice %81 {offsets = [0, 0, 1], sizes = [2, 8, 16], strides = [1, 1, 1]} : vector<2x8x20xf32> to vector<2x8x16xf32>
    %c2_52 = arith.constant 2 : index
    %c0_53 = arith.constant 0 : index
    %c0_54 = arith.constant 0 : index
    %100 = vector.load %arg8[%c2_52, %c0_53, %c0_54] : memref<3x8x1xf32, #tpu.memory_space<vmem>>, vector<1x8x1xf32>
    %101 = vector.shape_cast %100 : vector<1x8x1xf32> to vector<8x1xf32>
    %102 = vector.shape_cast %101 : vector<8x1xf32> to vector<1x8x1xf32>
    %103 = vector.broadcast %102 : vector<1x8x1xf32> to vector<2x8x16xf32>
    %104 = arith.mulf %99, %103 : vector<2x8x16xf32>
    %cst_55 = arith.constant dense<0.000000e+00> : vector<2x16xf32>
    %105 = vector.multi_reduction <add>, %104, %cst_55 [1] : vector<2x8x16xf32> to vector<2x16xf32>
    %106 = vector.shape_cast %105 : vector<2x16xf32> to vector<2x1x16xf32>
    %107 = arith.addf %98, %106 : vector<2x1x16xf32>
    %c0_56 = arith.constant 0 : index
    %c0_57 = arith.constant 0 : index
    %108 = vector.load %arg9[%c0_56, %c0_57] : memref<1x1xf32, #tpu.memory_space<vmem>>, vector<1x1xf32>
    %109 = vector.shape_cast %108 : vector<1x1xf32> to vector<1x1x1xf32>
    %110 = vector.broadcast %109 : vector<1x1x1xf32> to vector<2x1x16xf32>
    %111 = arith.addf %107, %110 : vector<2x1x16xf32>
    %c0_58 = arith.constant 0 : index
    %c0_59 = arith.constant 0 : index
    %c0_60 = arith.constant 0 : index
    %112 = vector.load %arg10[%c0_58, %c0_59, %c0_60] : memref<2x1x16xf32, #tpu.memory_space<vmem>>, vector<2x1x16xf32>
    tpu.vector_store %arg10[%c0_58, %c0_59, %c0_60], %111 {strides = array<i32>} : memref<2x1x16xf32, #tpu.memory_space<vmem>>, vector<2x1x16xf32>,
    return
  }
  func.func @transform_0(%arg0: i32) -> (i32, i32, i32) {
    %c0_i32 = arith.constant 0 : i32
    %c0_i32_0 = arith.constant 0 : i32
    %c0_i32_1 = arith.constant 0 : i32
    return %arg0, %c0_i32, %c0_i32_0 : i32, i32, i32
  }
  func.func @transform_1(%arg0: i32) -> (i32, i32, i32) {
    %c0_i32 = arith.constant 0 : i32
    %c0_i32_0 = arith.constant 0 : i32
    %c0_i32_1 = arith.constant 0 : i32
    %c0_i32_2 = arith.constant 0 : i32
    return %c0_i32, %c0_i32_0, %c0_i32_1 : i32, i32, i32
  }
  func.func @transform_2(%arg0: i32) -> (i32, i32) {
    %c0_i32 = arith.constant 0 : i32
    %c0_i32_0 = arith.constant 0 : i32
    %c0_i32_1 = arith.constant 0 : i32
    return %c0_i32, %c0_i32_0 : i32, i32
  }
  func.func @transform_3(%arg0: i32) -> (i32, i32, i32) {
    %c0_i32 = arith.constant 0 : i32
    %c0_i32_0 = arith.constant 0 : i32
    %c0_i32_1 = arith.constant 0 : i32
    %c0_i32_2 = arith.constant 0 : i32
    return %c0_i32, %c0_i32_0, %c0_i32_1 : i32, i32, i32
  }
  func.func @transform_4(%arg0: i32) -> (i32, i32) {
    %c0_i32 = arith.constant 0 : i32
    %c0_i32_0 = arith.constant 0 : i32
    %c0_i32_1 = arith.constant 0 : i32
    return %c0_i32, %c0_i32_0 : i32, i32
  }
  func.func @transform_5(%arg0: i32) -> (i32, i32, i32) {
    %c0_i32 = arith.constant 0 : i32
    %c0_i32_0 = arith.constant 0 : i32
    %c0_i32_1 = arith.constant 0 : i32
    %c0_i32_2 = arith.constant 0 : i32
    return %c0_i32, %c0_i32_0, %c0_i32_1 : i32, i32, i32
  }
  func.func @transform_6(%arg0: i32) -> (i32, i32) {
    %c0_i32 = arith.constant 0 : i32
    %c0_i32_0 = arith.constant 0 : i32
    %c0_i32_1 = arith.constant 0 : i32
    return %c0_i32, %c0_i32_0 : i32, i32
  }
  func.func @transform_7(%arg0: i32) -> (i32, i32, i32) {
    %c0_i32 = arith.constant 0 : i32
    %c0_i32_0 = arith.constant 0 : i32
    %c0_i32_1 = arith.constant 0 : i32
    %c0_i32_2 = arith.constant 0 : i32
    return %c0_i32, %c0_i32_0, %c0_i32_1 : i32, i32, i32
  }
  func.func @transform_8(%arg0: i32) -> (i32, i32) {
    %c0_i32 = arith.constant 0 : i32
    %c0_i32_0 = arith.constant 0 : i32
    %c0_i32_1 = arith.constant 0 : i32
    return %c0_i32, %c0_i32_0 : i32, i32
  }
  func.func @transform_9(%arg0: i32) -> (i32, i32, i32) {
    %c0_i32 = arith.constant 0 : i32
    %c0_i32_0 = arith.constant 0 : i32
    %c0_i32_1 = arith.constant 0 : i32
    return %arg0, %c0_i32, %c0_i32_0 : i32, i32, i32
  }
}

</mosaic_0001>

<llo_original>
// kernel: cnn_decoder_forward.1
$region0: #{cnn_decoder_forward.1}
  #allocation0 [shape = 'u32[]', space=smem, size = 0x4, offset = 0x4, fixed_abs, tag = 'smem constant byte address 0x4 - core index']
  #allocation1 [shape = 'u32[144,128]{1,0:T(1,128)}', space=vmem, size = 0x12000, scoped, tag = 'internal scratch']
  #allocation2 [shape = 'f32[1,1]{1,0:T(1,128)S(1)}', space=vmem, size = 0x200, scoped, tag = 'scoped memory for cnn_decoder_forward.1']
  %s0 = inlined_call_operand.vmem [shape: f32[4,64,32], index: 0, kind: input, shape index: {}]
  %s1 = inlined_call_operand.vmem [shape: bf16[3,32,64], index: 1, kind: input, shape index: {}]
  %s2 = inlined_call_operand.vmem [shape: f32[32,1], index: 2, kind: input, shape index: {}]
  %s3 = inlined_call_operand.vmem [shape: bf16[3,16,32], index: 3, kind: input, shape index: {}]
  %s4 = inlined_call_operand.vmem [shape: f32[16,1], index: 4, kind: input, shape index: {}]
  %s5 = inlined_call_operand.vmem [shape: bf16[3,8,16], index: 5, kind: input, shape index: {}]
  %s6 = inlined_call_operand.vmem [shape: f32[8,1], index: 6, kind: input, shape index: {}]
  %s7 = inlined_call_operand.vmem [shape: f32[3,8,1], index: 7, kind: input, shape index: {}]
  %s8 = inlined_call_operand.<no memory space> [shape: f32[1,1], index: 8, kind: input, shape index: {}]
  %s9 = inlined_call_operand.hbm [shape: f32[4,1,16], index: 9, kind: output, shape index: {}]
  %s10 = sld [smem:[#allocation0]]
  $region69: #{cnn_decoder_forward.1} parent=0
    _
  %s12 = ssub.s32 1, %s10
  %s13 = scalar_select 0, %s12, %s10
  %v14 = vstv %s8
  %15 = vst [vmem:[#allocation2] sm:$0x1] %v14
  $region1: #{cnn_decoder_forward.1} parent=0
    #allocation3 [shape = 'u8[2048]{0}', space=vmem, size = 0x800, scoped, tag = 'output window, operand 0']
    #allocation4 [shape = 's32[2]{0}', space=sflag, size = 0x8, scoped, tag = 'scoped memory for cnn_decoder_forward.1']
    %16 = vsyncpa [#allocation4], 0
    %s17 = scalar_lea.sflag [#allocation4], 1
    %18 = vsyncpa %s17, 0
    loop: start=0, step=1, limit=4
    $region2: #{cnn_decoder_forward.1} parent=1 // loop_pre_header
      _
    $region3: #{cnn_decoder_forward.1} parent=1 // loop_header
      %s20 = sphi 0, %s24
      %p21 = scmp.ge.s32.totalorder %s20, 4
      %s30 = sphi 0, %s32
      %s33 = sphi 0, %s30
      %s34 = sphi 0, %s33
      %s50 = sphi 0, %s34
      %s54 = sphi 0, %s54
      %s56 = sphi 0, %s54
      %s57 = sphi 0, %s56
      %s71 = sphi 0, %s57
      %s75 = sphi 0, %s75
      %s77 = sphi 0, %s75
      %s78 = sphi 0, %s77
      %s92 = sphi 0, %s78
      %s96 = sphi 0, %s96
      %s98 = sphi 0, %s96
      %s99 = sphi 0, %s98
      %s113 = sphi 0, %s99
      %s117 = sphi 0, %s117
      %s119 = sphi 0, %s117
      %s120 = sphi 0, %s119
      %s134 = sphi 0, %s120
      %s138 = sphi 0, %s138
      %s140 = sphi 0, %s138
      %s141 = sphi 0, %s140
      %s155 = sphi 0, %s141
      %s159 = sphi 0, %s159
      %s161 = sphi 0, %s159
      %s162 = sphi 0, %s161
      %s176 = sphi 0, %s162
      %s180 = sphi 0, %s180
      %s182 = sphi 0, %s180
      %s183 = sphi 0, %s182
      %s197 = sphi 0, %s183
      %s201 = sphi 0, %s201
      %s203 = sphi 0, %s201
      %s204 = sphi 0, %s203
      %s218 = sphi 0, %s204
      %s224 = sphi 0, %s226
      %s227 = sphi 0, %s224
      %s228 = sphi 0, %s227
      %s244 = sphi 0, %s228
    $region4: #{cnn_decoder_forward.1} parent=1 // loop_header_branch
      %23 = sbr.rel (%p21) target = $region8
    $region5: #{cnn_decoder_forward.1} parent=1 // loop_body
      %s25 = ssub.s32 %s20, 1
      %s26 = ssub.s32 %s20, 2
      %s27 = sadd.s32 %s20, 1
      %s28 = ssub.s32 %s20, %s27
      %p29 = scmp.eq.s32.totalorder %s28, 0
      %s31 = sadd.s32 %s30, 1
      %s32 = scalar_select %p29, %s30, %s31
      %p35 = pneg %p29
      %p36 = scmp.eq.s32.totalorder %s20, 1
      %p37 = por %p35, %p36
      %p38 = scmp.ne.s32.totalorder %s30, %s33
      %p39 = scmp.eq.s32.totalorder %s20, 0
      %p40 = por %p38, %p39
      %p41 = scmp.ne.s32.totalorder %s30, %s33
      %p42 = scmp.eq.s32.totalorder %s25, 1
      %p43 = por %p41, %p42
      %p44 = scmp.ne.s32.totalorder %s33, %s34
      %p45 = scmp.eq.s32.totalorder %s25, 0
      %p46 = por %p44, %p45
      %p47 = scmp.ne.s32.totalorder %s33, %s34
      %p48 = scmp.eq.s32.totalorder %s26, 1
      %p49 = por %p47, %p48
      %p51 = scmp.ne.s32.totalorder %s34, %s50
      %p52 = scmp.eq.s32.totalorder %s26, 0
      %p53 = por %p51, %p52
      %s55 = sadd.s32 %s54, 1
      %p58 = scmp.eq.s32.totalorder %s20, 1
      %p59 = scmp.ne.s32.totalorder %s54, %s56
      %p60 = scmp.eq.s32.totalorder %s20, 0
      %p61 = por %p59, %p60
      %p62 = scmp.ne.s32.totalorder %s54, %s56
      %p63 = scmp.eq.s32.totalorder %s25, 1
      %p64 = por %p62, %p63
      %p65 = scmp.ne.s32.totalorder %s56, %s57
      %p66 = scmp.eq.s32.totalorder %s25, 0
      %p67 = por %p65, %p66
      %p68 = scmp.ne.s32.totalorder %s56, %s57
      %p69 = scmp.eq.s32.totalorder %s26, 1
      %p70 = por %p68, %p69
      %p72 = scmp.ne.s32.totalorder %s57, %s71
      %p73 = scmp.eq.s32.totalorder %s26, 0
      %p74 = por %p72, %p73
      %s76 = sadd.s32 %s75, 1
      %p79 = scmp.eq.s32.totalorder %s20, 1
      %p80 = scmp.ne.s32.totalorder %s75, %s77
      %p81 = scmp.eq.s32.totalorder %s20, 0
      %p82 = por %p80, %p81
      %p83 = scmp.ne.s32.totalorder %s75, %s77
      %p84 = scmp.eq.s32.totalorder %s25, 1
      %p85 = por %p83, %p84
      %p86 = scmp.ne.s32.totalorder %s77, %s78
      %p87 = scmp.eq.s32.totalorder %s25, 0
      %p88 = por %p86, %p87
      %p89 = scmp.ne.s32.totalorder %s77, %s78
      %p90 = scmp.eq.s32.totalorder %s26, 1
      %p91 = por %p89, %p90
      %p93 = scmp.ne.s32.totalorder %s78, %s92
      %p94 = scmp.eq.s32.totalorder %s26, 0
      %p95 = por %p93, %p94
      %s97 = sadd.s32 %s96, 1
      %p100 = scmp.eq.s32.totalorder %s20, 1
      %p101 = scmp.ne.s32.totalorder %s96, %s98
      %p102 = scmp.eq.s32.totalorder %s20, 0
      %p103 = por %p101, %p102
      %p104 = scmp.ne.s32.totalorder %s96, %s98
      %p105 = scmp.eq.s32.totalorder %s25, 1
      %p106 = por %p104, %p105
      %p107 = scmp.ne.s32.totalorder %s98, %s99
      %p108 = scmp.eq.s32.totalorder %s25, 0
      %p109 = por %p107, %p108
      %p110 = scmp.ne.s32.totalorder %s98, %s99
      %p111 = scmp.eq.s32.totalorder %s26, 1
      %p112 = por %p110, %p111
      %p114 = scmp.ne.s32.totalorder %s99, %s113
      %p115 = scmp.eq.s32.totalorder %s26, 0
      %p116 = por %p114, %p115
      %s118 = sadd.s32 %s117, 1
      %p121 = scmp.eq.s32.totalorder %s20, 1
      %p122 = scmp.ne.s32.totalorder %s117, %s119
      %p123 = scmp.eq.s32.totalorder %s20, 0
      %p124 = por %p122, %p123
      %p125 = scmp.ne.s32.totalorder %s117, %s119
      %p126 = scmp.eq.s32.totalorder %s25, 1
      %p127 = por %p125, %p126
      %p128 = scmp.ne.s32.totalorder %s119, %s120
      %p129 = scmp.eq.s32.totalorder %s25, 0
      %p130 = por %p128, %p129
      %p131 = scmp.ne.s32.totalorder %s119, %s120
      %p132 = scmp.eq.s32.totalorder %s26, 1
      %p133 = por %p131, %p132
      %p135 = scmp.ne.s32.totalorder %s120, %s134
      %p136 = scmp.eq.s32.totalorder %s26, 0
      %p137 = por %p135, %p136
      %s139 = sadd.s32 %s138, 1
      %p142 = scmp.eq.s32.totalorder %s20, 1
      %p143 = scmp.ne.s32.totalorder %s138, %s140
      %p144 = scmp.eq.s32.totalorder %s20, 0
      %p145 = por %p143, %p144
      %p146 = scmp.ne.s32.totalorder %s138, %s140
      %p147 = scmp.eq.s32.totalorder %s25, 1
      %p148 = por %p146, %p147
      %p149 = scmp.ne.s32.totalorder %s140, %s141
      %p150 = scmp.eq.s32.totalorder %s25, 0
      %p151 = por %p149, %p150
      %p152 = scmp.ne.s32.totalorder %s140, %s141
      %p153 = scmp.eq.s32.totalorder %s26, 1
      %p154 = por %p152, %p153
      %p156 = scmp.ne.s32.totalorder %s141, %s155
      %p157 = scmp.eq.s32.totalorder %s26, 0
      %p158 = por %p156, %p157
      %s160 = sadd.s32 %s159, 1
      %p163 = scmp.eq.s32.totalorder %s20, 1
      %p164 = scmp.ne.s32.totalorder %s159, %s161
      %p165 = scmp.eq.s32.totalorder %s20, 0
      %p166 = por %p164, %p165
      %p167 = scmp.ne.s32.totalorder %s159, %s161
      %p168 = scmp.eq.s32.totalorder %s25, 1
      %p169 = por %p167, %p168
      %p170 = scmp.ne.s32.totalorder %s161, %s162
      %p171 = scmp.eq.s32.totalorder %s25, 0
      %p172 = por %p170, %p171
      %p173 = scmp.ne.s32.totalorder %s161, %s162
      %p174 = scmp.eq.s32.totalorder %s26, 1
      %p175 = por %p173, %p174
      %p177 = scmp.ne.s32.totalorder %s162, %s176
      %p178 = scmp.eq.s32.totalorder %s26, 0
      %p179 = por %p177, %p178
      %s181 = sadd.s32 %s180, 1
      %p184 = scmp.eq.s32.totalorder %s20, 1
      %p185 = scmp.ne.s32.totalorder %s180, %s182
      %p186 = scmp.eq.s32.totalorder %s20, 0
      %p187 = por %p185, %p186
      %p188 = scmp.ne.s32.totalorder %s180, %s182
      %p189 = scmp.eq.s32.totalorder %s25, 1
      %p190 = por %p188, %p189
      %p191 = scmp.ne.s32.totalorder %s182, %s183
      %p192 = scmp.eq.s32.totalorder %s25, 0
      %p193 = por %p191, %p192
      %p194 = scmp.ne.s32.totalorder %s182, %s183
      %p195 = scmp.eq.s32.totalorder %s26, 1
      %p196 = por %p194, %p195
      %p198 = scmp.ne.s32.totalorder %s183, %s197
      %p199 = scmp.eq.s32.totalorder %s26, 0
      %p200 = por %p198, %p199
      %s202 = sadd.s32 %s201, 1
      %p205 = scmp.eq.s32.totalorder %s20, 1
      %p206 = scmp.ne.s32.totalorder %s201, %s203
      %p207 = scmp.eq.s32.totalorder %s20, 0
      %p208 = por %p206, %p207
      %p209 = scmp.ne.s32.totalorder %s201, %s203
      %p210 = scmp.eq.s32.totalorder %s25, 1
      %p211 = por %p209, %p210
      %p212 = scmp.ne.s32.totalorder %s203, %s204
      %p213 = scmp.eq.s32.totalorder %s25, 0
      %p214 = por %p212, %p213
      %p215 = scmp.ne.s32.totalorder %s203, %s204
      %p216 = scmp.eq.s32.totalorder %s26, 1
      %p217 = por %p215, %p216
      %p219 = scmp.ne.s32.totalorder %s204, %s218
      %p220 = scmp.eq.s32.totalorder %s26, 0
      %p221 = por %p219, %p220
      %s222 = ssub.s32 %s20, %s27
      %p223 = scmp.eq.s32.totalorder %s222, 0
      %s225 = sadd.s32 %s224, 1
      %s226 = scalar_select %p223, %s224, %s225
      %p229 = pneg %p223
      %p230 = scmp.eq.s32.totalorder %s20, 1
      %p231 = por %p229, %p230
      %p232 = scmp.ne.s32.totalorder %s224, %s227
      %p233 = scmp.eq.s32.totalorder %s20, 0
      %p234 = por %p232, %p233
      %p235 = scmp.ne.s32.totalorder %s224, %s227
      %p236 = scmp.eq.s32.totalorder %s25, 1
      %p237 = por %p235, %p236
      %p238 = scmp.ne.s32.totalorder %s227, %s228
      %p239 = scmp.eq.s32.totalorder %s25, 0
      %p240 = por %p238, %p239
      %p241 = scmp.ne.s32.totalorder %s227, %s228
      %p242 = scmp.eq.s32.totalorder %s26, 1
      %p243 = por %p241, %p242
      %p245 = scmp.ne.s32.totalorder %s228, %s244
      %p246 = scmp.eq.s32.totalorder %s26, 0
      %p247 = por %p245, %p246
      %p248 = scmp.le.s32.totalorder 1, %s20
      %p249 = scmp.lt.s32.totalorder %s20, 3
      %p250 = pnand %p248, %p249
      %p251 = pneg %p250
      // Predicated region
      $region9: #{cnn_decoder_forward.1} parent=5 // pred_check
        _
      $region10: #{cnn_decoder_forward.1} parent=5 // pred_check_branch
        %253 = sbr.rel (%p250) target = $region12
      $region11: #{cnn_decoder_forward.1} parent=5 // pred_region
        %s254 = ssub.s32 %s20, 1
        // Predicated region
        $region13: #{cnn_decoder_forward.1} parent=11 // pred_check
          %p255 = pneg %p67
        $region14: #{cnn_decoder_forward.1} parent=11 // pred_check_branch
          %257 = sbr.rel (%p255) target = $region16
        $region15: #{cnn_decoder_forward.1} parent=11 // pred_region
          _
        $region16: #{cnn_decoder_forward.1} parent=11 // pred_fallthru
          _
        // Predicated region
        $region17: #{cnn_decoder_forward.1} parent=11 // pred_check
          %p258 = pneg %p88
        $region18: #{cnn_decoder_forward.1} parent=11 // pred_check_branch
          %260 = sbr.rel (%p258) target = $region20
        $region19: #{cnn_decoder_forward.1} parent=11 // pred_region
          _
        $region20: #{cnn_decoder_forward.1} parent=11 // pred_fallthru
          _
        // Predicated region
        $region21: #{cnn_decoder_forward.1} parent=11 // pred_check
          %p261 = pneg %p109
        $region22: #{cnn_decoder_forward.1} parent=11 // pred_check_branch
          %263 = sbr.rel (%p261) target = $region24
        $region23: #{cnn_decoder_forward.1} parent=11 // pred_region
          _
        $region24: #{cnn_decoder_forward.1} parent=11 // pred_fallthru
          _
        // Predicated region
        $region25: #{cnn_decoder_forward.1} parent=11 // pred_check
          %p264 = pneg %p130
        $region26: #{cnn_decoder_forward.1} parent=11 // pred_check_branch
          %266 = sbr.rel (%p264) target = $region28
        $region27: #{cnn_decoder_forward.1} parent=11 // pred_region
          _
        $region28: #{cnn_decoder_forward.1} parent=11 // pred_fallthru
          _
        // Predicated region
        $region29: #{cnn_decoder_forward.1} parent=11 // pred_check
          %p267 = pneg %p151
        $region30: #{cnn_decoder_forward.1} parent=11 // pred_check_branch
          %269 = sbr.rel (%p267) target = $region32
        $region31: #{cnn_decoder_forward.1} parent=11 // pred_region
          _
        $region32: #{cnn_decoder_forward.1} parent=11 // pred_fallthru
          _
        // Predicated region
        $region33: #{cnn_decoder_forward.1} parent=11 // pred_check
          %p270 = pneg %p172
        $region34: #{cnn_decoder_forward.1} parent=11 // pred_check_branch
          %272 = sbr.rel (%p270) target = $region36
        $region35: #{cnn_decoder_forward.1} parent=11 // pred_region
          _
        $region36: #{cnn_decoder_forward.1} parent=11 // pred_fallthru
          _
        // Predicated region
        $region37: #{cnn_decoder_forward.1} parent=11 // pred_check
          %p273 = pneg %p193
        $region38: #{cnn_decoder_forward.1} parent=11 // pred_check_branch
          %275 = sbr.rel (%p273) target = $region40
        $region39: #{cnn_decoder_forward.1} parent=11 // pred_region
          _
        $region40: #{cnn_decoder_forward.1} parent=11 // pred_fallthru
          _
        // Predicated region
        $region41: #{cnn_decoder_forward.1} parent=11 // pred_check
          %p276 = pneg %p214
        $region42: #{cnn_decoder_forward.1} parent=11 // pred_check_branch
          %278 = sbr.rel (%p276) target = $region44
        $region43: #{cnn_decoder_forward.1} parent=11 // pred_region
          _
        $region44: #{cnn_decoder_forward.1} parent=11 // pred_fallthru
          _
      $region12: #{cnn_decoder_forward.1} parent=5 // pred_fallthru
        _
      %p279 = scmp.lt.s32.totalorder %s20, 2
      // Predicated region
      $region45: #{cnn_decoder_forward.1} parent=5 // pred_check
        %p280 = pneg %p279
      $region46: #{cnn_decoder_forward.1} parent=5 // pred_check_branch
        %282 = sbr.rel (%p280) target = $region48
      $region47: #{cnn_decoder_forward.1} parent=5 // pred_region
        // Predicated region
        $region49: #{cnn_decoder_forward.1} parent=47 // pred_check
          %p283 = pneg %p40
        $region50: #{cnn_decoder_forward.1} parent=47 // pred_check_branch
          %285 = sbr.rel (%p283) target = $region52
        $region51: #{cnn_decoder_forward.1} parent=47 // pred_region
          %s286 = smul.u32 2, %s20
          %p287 = scmp.lt.s32.totalorder %s286, 3
          %s288 = scalar_select %p287, %s286, 3
          %s289 = smul.addr %s288, 8
          %s290 = smul.addr %s289, 8
          %s291 = scalar_lea.vmem %s0, %s290
          %s292 = smul.u32 2, %s20
        $region52: #{cnn_decoder_forward.1} parent=47 // pred_fallthru
          _
      $region48: #{cnn_decoder_forward.1} parent=5 // pred_fallthru
        _
      %p293 = scmp.le.s32.totalorder 1, %s20
      %p294 = scmp.lt.s32.totalorder %s20, 3
      %p295 = pnand %p293, %p294
      %p296 = pneg %p295
      // Predicated region
      $region53: #{cnn_decoder_forward.1} parent=5 // pred_check
        _
      $region54: #{cnn_decoder_forward.1} parent=5 // pred_check_branch
        %298 = sbr.rel (%p295) target = $region56
      $region55: #{cnn_decoder_forward.1} parent=5 // pred_region
        %s299 = ssub.s32 %s20, 1
        %s300 = smul.u32 2, %s25
        %p301 = scmp.lt.s32.totalorder %s300, 3
        %s302 = scalar_select %p301, %s300, 3
        %s303 = smul.addr %s302, 8
        %s304 = smul.addr %s303, 8
        %s305 = scalar_lea.vmem %s0, %s304
        %p306 = pneg %p46
        %p307 = pneg %p43
        %p308 = pneg %p67
        %p309 = pneg %p64
        %p310 = pneg %p88
        %p311 = pneg %p85
        %p312 = pneg %p109
        %p313 = pneg %p106
        %p314 = pneg %p130
        %p315 = pneg %p127
        %p316 = pneg %p151
        %p317 = pneg %p148
        %p318 = pneg %p172
        %p319 = pneg %p169
        %p320 = pneg %p193
        %p321 = pneg %p190
        %p322 = pneg %p214
        %p323 = pneg %p211
        %p324 = pneg %p240
        %p325 = pneg %p237
        %s326 = sand.u32 %s227, 1
        %s327 = scalar_lea.sflag [#allocation4], %s326
        %s328 = sand.u32 %s227, 1
        %s329 = smul.addr %s328, 2
        %s330 = scalar_lea.vmem [#allocation3], %s329
        %s331 = smul.u32 2, %s25
        %p332 = scmp.lt.s32.totalorder %s331, 3
        %s333 = scalar_select %p332, %s331, 3
        %s334 = smul.addr %s333, 8
        %s335 = smul.addr %s334, 8
        %s336 = scalar_lea.vmem %s0, %s335
        %s337 = smul.u32 2, %s25
        %s338 = smul.u32 2, %s25
        %v340 = vld [vmem:[%s336] sm:$0xff]
        %v341 = vld [vmem:[%s336 + $0x8] sm:$0xff]
        %v342 = vld [vmem:[%s336 + $0x10] sm:$0xff]
        %v343 = vld [vmem:[%s336 + $0x18] sm:$0xff]
        %v344 = vld [vmem:[%s336 + $0x20] sm:$0xff]
        %v345 = vld [vmem:[%s336 + $0x28] sm:$0xff]
        %v346 = vld [vmem:[%s336 + $0x30] sm:$0xff]
        %v347 = vld [vmem:[%s336 + $0x38] sm:$0xff]
        %v348 = vld [vmem:[%s336 + $0x40] sm:$0xff]
        %v349 = vld [vmem:[%s336 + $0x48] sm:$0xff]
        %v350 = vld [vmem:[%s336 + $0x50] sm:$0xff]
        %v351 = vld [vmem:[%s336 + $0x58] sm:$0xff]
        %v352 = vld [vmem:[%s336 + $0x60] sm:$0xff]
        %v353 = vld [vmem:[%s336 + $0x68] sm:$0xff]
        %v354 = vld [vmem:[%s336 + $0x70] sm:$0xff]
        %v355 = vld [vmem:[%s336 + $0x78] sm:$0xff]
        %v356 = vpack.c.bf16 %v341, %v340
        %v357 = vpack.c.bf16 %v343, %v342
        %v358 = vpack.c.bf16 %v345, %v344
        %v359 = vpack.c.bf16 %v347, %v346
        %v360 = vpack.c.bf16 %v349, %v348
        %v361 = vpack.c.bf16 %v351, %v350
        %v362 = vpack.c.bf16 %v353, %v352
        %v363 = vpack.c.bf16 %v355, %v354
        %v364 = vld [vmem:[%s1] sm:$0xf]
        %v365 = vld [vmem:[%s1 + $0x4] sm:$0xf]
        %v366 = vld [vmem:[%s1 + $0x8] sm:$0xf]
        %v367 = vld [vmem:[%s1 + $0xc] sm:$0xf]
        %s368 = scalar_lea.vmem %s1, 16
        %v369 = vld [vmem:[%s368] sm:$0xf]
        %v370 = vld [vmem:[%s368 + $0x4] sm:$0xf]
        %v371 = vld [vmem:[%s368 + $0x8] sm:$0xf]
        %v372 = vld [vmem:[%s368 + $0xc] sm:$0xf]
        %v377 = vunpack.c.l.b16 %v369
        %v378 = vunpack.c.l.b16 %v370
        %v379 = vunpack.c.l.b16 %v371
        %v380 = vunpack.c.l.b16 %v372
        %v381 = vpack.c.b16 %v378, %v377
        %v382 = vpack.c.b16 %v380, %v379
        %387 = vrot.lane.b32.xlu0 %v356, 126
        %v388 = vpop.permute.xlu0 %387
        %389 = vrot.lane.b32.xlu0 %v357, 126
        %v390 = vpop.permute.xlu0 %389
        %391 = vrot.lane.b32.xlu0 %v358, 126
        %v392 = vpop.permute.xlu0 %391
        %393 = vrot.lane.b32.xlu0 %v359, 126
        %v394 = vpop.permute.xlu0 %393
        %vm399 = vcmask 523264
        %v401 = vsel %vm399, %v381, 0
        %v404 = vsel %vm399, %v382, 0
        %406 = vmatprep.subr.bf16.mxu0 0
        %407 = vmatpush1.bf16.msra.mxu0 %v388
        %408 = vmatprep.subr.bf16.mxu0 0
        %409 = vmatpush1.bf16.msra.mxu0 %v390
        %410 = vmatprep.subr.bf16.mxu0 0
        %411 = vmatpush1.bf16.msra.mxu0 %v392
        %412 = vmatprep.subr.bf16.mxu0 0
        %413 = vmatpush1.bf16.msra.mxu0 %v394
        %414 = vmatprep.subr.bf16.mxu0 0
        %415 = vmatpush1.bf16.msra.mxu0 0
        %416 = vmatprep.subr.bf16.mxu0 0
        %417 = vmatpush1.bf16.msra.mxu0 0
        %418 = vmatprep.subr.bf16.mxu0 0
        %419 = vmatpush1.bf16.msra.mxu0 0
        %420 = vmatprep.subr.bf16.mxu0 0
        %421 = vmatpush1.bf16.msra.mxu0 0
        %422 = vmatprep.subr.bf16.mxu0 0
        %423 = vmatpush1.bf16.msra.mxu0 0
        %424 = vmatprep.subr.bf16.mxu0 0
        %425 = vmatpush1.bf16.msra.mxu0 0
        %426 = vmatprep.subr.bf16.mxu0 0
        %427 = vmatpush1.bf16.msra.mxu0 0
        %428 = vmatprep.subr.bf16.mxu0 0
        %429 = vmatpush1.bf16.msra.mxu0 0
        %430 = vmatprep.subr.bf16.mxu0 0
        %431 = vmatpush1.bf16.msra.mxu0 0
        %432 = vmatprep.subr.bf16.mxu0 0
        %433 = vmatpush1.bf16.msra.mxu0 0
        %434 = vmatprep.subr.bf16.mxu0 0
        %435 = vmatpush1.bf16.msra.mxu0 0
        %436 = vmatprep.subr.bf16.mxu0 0
        %437 = vmatpush1.bf16.msra.mxu0 0
        %438 = vmatprep.mubr.bf16.mxu0 0
        %439 = vmatmul.mubr.bf16.gmra.mrb[0].mxu0 %v401
        %v440 = vpop.f32.mrb[0].mxu0
        %v441 = vadd.f32 0.0, %v440
        %v442 = vpop.f32.mrb[0].mxu0
        %v443 = vpop.f32.mrb[0].mxu0
        %v444 = vadd.f32 0.0, %v443
        %v445 = vpop.f32.mrb[0].mxu0
        %446 = vmatprep.mubr.bf16.mxu0 0
        %447 = vmatmul.mubr.bf16.gmra.mrb[0].mxu0 %v404
        %v448 = vpop.f32.mrb[0].mxu0
        %v449 = vadd.f32 0.0, %v448
        %v450 = vpop.f32.mrb[0].mxu0
        %v451 = vpop.f32.mrb[0].mxu0
        %v452 = vadd.f32 0.0, %v451
        %v453 = vpop.f32.mrb[0].mxu0
        %454 = vdwg.mxu0
        %459 = vrot.lane.b32.xlu0 %v360, 126
        %v460 = vpop.permute.xlu0 %459
        %461 = vrot.lane.b32.xlu0 %v361, 126
        %v462 = vpop.permute.xlu0 %461
        %463 = vrot.lane.b32.xlu0 %v362, 126
        %v464 = vpop.permute.xlu0 %463
        %465 = vrot.lane.b32.xlu0 %v363, 126
        %v466 = vpop.permute.xlu0 %465
        %471 = vmatprep.subr.bf16.mxu0 0
        %472 = vmatpush1.bf16.msra.mxu0 %v460
        %473 = vmatprep.subr.bf16.mxu0 0
        %474 = vmatpush1.bf16.msra.mxu0 %v462
        %475 = vmatprep.subr.bf16.mxu0 0
        %476 = vmatpush1.bf16.msra.mxu0 %v464
        %477 = vmatprep.subr.bf16.mxu0 0
        %478 = vmatpush1.bf16.msra.mxu0 %v466
        %479 = vmatprep.subr.bf16.mxu0 0
        %480 = vmatpush1.bf16.msra.mxu0 0
        %481 = vmatprep.subr.bf16.mxu0 0
        %482 = vmatpush1.bf16.msra.mxu0 0
        %483 = vmatprep.subr.bf16.mxu0 0
        %484 = vmatpush1.bf16.msra.mxu0 0
        %485 = vmatprep.subr.bf16.mxu0 0
        %486 = vmatpush1.bf16.msra.mxu0 0
        %487 = vmatprep.subr.bf16.mxu0 0
        %488 = vmatpush1.bf16.msra.mxu0 0
        %489 = vmatprep.subr.bf16.mxu0 0
        %490 = vmatpush1.bf16.msra.mxu0 0
        %491 = vmatprep.subr.bf16.mxu0 0
        %492 = vmatpush1.bf16.msra.mxu0 0
        %493 = vmatprep.subr.bf16.mxu0 0
        %494 = vmatpush1.bf16.msra.mxu0 0
        %495 = vmatprep.subr.bf16.mxu0 0
        %496 = vmatpush1.bf16.msra.mxu0 0
        %497 = vmatprep.subr.bf16.mxu0 0
        %498 = vmatpush1.bf16.msra.mxu0 0
        %499 = vmatprep.subr.bf16.mxu0 0
        %500 = vmatpush1.bf16.msra.mxu0 0
        %501 = vmatprep.subr.bf16.mxu0 0
        %502 = vmatpush1.bf16.msra.mxu0 0
        %503 = vmatprep.mubr.bf16.mxu0 0
        %504 = vmatmul.mubr.bf16.gmra.mrb[0].mxu0 %v401
        %v505 = vpop.f32.mrb[0].mxu0
        %v506 = vadd.f32 0.0, %v505
        %v507 = vpop.f32.mrb[0].mxu0
        %v508 = vpop.f32.mrb[0].mxu0
        %v509 = vadd.f32 0.0, %v508
        %v510 = vpop.f32.mrb[0].mxu0
        %511 = vmatprep.mubr.bf16.mxu0 0
        %512 = vmatmul.mubr.bf16.gmra.mrb[0].mxu0 %v404
        %v513 = vpop.f32.mrb[0].mxu0
        %v514 = vadd.f32 0.0, %v513
        %v515 = vpop.f32.mrb[0].mxu0
        %v516 = vpop.f32.mrb[0].mxu0
        %v517 = vadd.f32 0.0, %v516
        %v518 = vpop.f32.mrb[0].mxu0
        %519 = vdwg.mxu0
        %v524 = vunpack.c.l.b16 %v364
        %v525 = vunpack.c.l.b16 %v365
        %v526 = vunpack.c.l.b16 %v366
        %v527 = vunpack.c.l.b16 %v367
        %v528 = vpack.c.b16 %v525, %v524
        %v529 = vpack.c.b16 %v527, %v526
        %530 = vrot.lane.b32.xlu0 %v356, 125
        %v531 = vpop.permute.xlu0 %530
        %532 = vrot.lane.b32.xlu0 %v357, 125
        %v533 = vpop.permute.xlu0 %532
        %534 = vrot.lane.b32.xlu0 %v358, 125
        %v535 = vpop.permute.xlu0 %534
        %536 = vrot.lane.b32.xlu0 %v359, 125
        %v537 = vpop.permute.xlu0 %536
        %v543 = vsel %vm399, %v528, 0
        %v546 = vsel %vm399, %v529, 0
        %548 = vmatprep.subr.bf16.mxu0 0
        %549 = vmatpush1.bf16.msra.mxu0 %v531
        %550 = vmatprep.subr.bf16.mxu0 0
        %551 = vmatpush1.bf16.msra.mxu0 %v533
        %552 = vmatprep.subr.bf16.mxu0 0
        %553 = vmatpush1.bf16.msra.mxu0 %v535
        %554 = vmatprep.subr.bf16.mxu0 0
        %555 = vmatpush1.bf16.msra.mxu0 %v537
        %556 = vmatprep.subr.bf16.mxu0 0
        %557 = vmatpush1.bf16.msra.mxu0 0
        %558 = vmatprep.subr.bf16.mxu0 0
        %559 = vmatpush1.bf16.msra.mxu0 0
        %560 = vmatprep.subr.bf16.mxu0 0
        %561 = vmatpush1.bf16.msra.mxu0 0
        %562 = vmatprep.subr.bf16.mxu0 0
        %563 = vmatpush1.bf16.msra.mxu0 0
        %564 = vmatprep.subr.bf16.mxu0 0
        %565 = vmatpush1.bf16.msra.mxu0 0
        %566 = vmatprep.subr.bf16.mxu0 0
        %567 = vmatpush1.bf16.msra.mxu0 0
        %568 = vmatprep.subr.bf16.mxu0 0
        %569 = vmatpush1.bf16.msra.mxu0 0
        %570 = vmatprep.subr.bf16.mxu0 0
        %571 = vmatpush1.bf16.msra.mxu0 0
        %572 = vmatprep.subr.bf16.mxu0 0
        %573 = vmatpush1.bf16.msra.mxu0 0
        %574 = vmatprep.subr.bf16.mxu0 0
        %575 = vmatpush1.bf16.msra.mxu0 0
        %576 = vmatprep.subr.bf16.mxu0 0
        %577 = vmatpush1.bf16.msra.mxu0 0
        %578 = vmatprep.subr.bf16.mxu0 0
        %579 = vmatpush1.bf16.msra.mxu0 0
        %580 = vmatprep.mubr.bf16.mxu0 0
        %581 = vmatmul.mubr.bf16.gmra.mrb[0].mxu0 %v543
        %v582 = vpop.f32.mrb[0].mxu0
        %v583 = vadd.f32 %v441, %v582
        %v584 = vpop.f32.mrb[0].mxu0
        %v585 = vpop.f32.mrb[0].mxu0
        %v586 = vadd.f32 %v444, %v585
        %v587 = vpop.f32.mrb[0].mxu0
        %588 = vmatprep.mubr.bf16.mxu0 0
        %589 = vmatmul.mubr.bf16.gmra.mrb[0].mxu0 %v546
        %v590 = vpop.f32.mrb[0].mxu0
        %v591 = vadd.f32 %v449, %v590
        %v592 = vpop.f32.mrb[0].mxu0
        %v593 = vpop.f32.mrb[0].mxu0
        %v594 = vadd.f32 %v452, %v593
        %v595 = vpop.f32.mrb[0].mxu0
        %596 = vdwg.mxu0
        %597 = vrot.lane.b32.xlu0 %v360, 125
        %v598 = vpop.permute.xlu0 %597
        %599 = vrot.lane.b32.xlu0 %v361, 125
        %v600 = vpop.permute.xlu0 %599
        %601 = vrot.lane.b32.xlu0 %v362, 125
        %v602 = vpop.permute.xlu0 %601
        %603 = vrot.lane.b32.xlu0 %v363, 125
        %v604 = vpop.permute.xlu0 %603
        %609 = vmatprep.subr.bf16.mxu0 0
        %610 = vmatpush1.bf16.msra.mxu0 %v598
        %611 = vmatprep.subr.bf16.mxu0 0
        %612 = vmatpush1.bf16.msra.mxu0 %v600
        %613 = vmatprep.subr.bf16.mxu0 0
        %614 = vmatpush1.bf16.msra.mxu0 %v602
        %615 = vmatprep.subr.bf16.mxu0 0
        %616 = vmatpush1.bf16.msra.mxu0 %v604
        %617 = vmatprep.subr.bf16.mxu0 0
        %618 = vmatpush1.bf16.msra.mxu0 0
        %619 = vmatprep.subr.bf16.mxu0 0
        %620 = vmatpush1.bf16.msra.mxu0 0
        %621 = vmatprep.subr.bf16.mxu0 0
        %622 = vmatpush1.bf16.msra.mxu0 0
        %623 = vmatprep.subr.bf16.mxu0 0
        %624 = vmatpush1.bf16.msra.mxu0 0
        %625 = vmatprep.subr.bf16.mxu0 0
        %626 = vmatpush1.bf16.msra.mxu0 0
        %627 = vmatprep.subr.bf16.mxu0 0
        %628 = vmatpush1.bf16.msra.mxu0 0
        %629 = vmatprep.subr.bf16.mxu0 0
        %630 = vmatpush1.bf16.msra.mxu0 0
        %631 = vmatprep.subr.bf16.mxu0 0
        %632 = vmatpush1.bf16.msra.mxu0 0
        %633 = vmatprep.subr.bf16.mxu0 0
        %634 = vmatpush1.bf16.msra.mxu0 0
        %635 = vmatprep.subr.bf16.mxu0 0
        %636 = vmatpush1.bf16.msra.mxu0 0
        %637 = vmatprep.subr.bf16.mxu0 0
        %638 = vmatpush1.bf16.msra.mxu0 0
        %639 = vmatprep.subr.bf16.mxu0 0
        %640 = vmatpush1.bf16.msra.mxu0 0
        %641 = vmatprep.mubr.bf16.mxu0 0
        %642 = vmatmul.mubr.bf16.gmra.mrb[0].mxu0 %v543
        %v643 = vpop.f32.mrb[0].mxu0
        %v644 = vadd.f32 %v506, %v643
        %v645 = vpop.f32.mrb[0].mxu0
        %v646 = vpop.f32.mrb[0].mxu0
        %v647 = vadd.f32 %v509, %v646
        %v648 = vpop.f32.mrb[0].mxu0
        %649 = vmatprep.mubr.bf16.mxu0 0
        %650 = vmatmul.mubr.bf16.gmra.mrb[0].mxu0 %v546
        %v651 = vpop.f32.mrb[0].mxu0
        %v652 = vadd.f32 %v514, %v651
        %v653 = vpop.f32.mrb[0].mxu0
        %v654 = vpop.f32.mrb[0].mxu0
        %v655 = vadd.f32 %v517, %v654
        %v656 = vpop.f32.mrb[0].mxu0
        %657 = vdwg.mxu0
        %s658 = scalar_lea.vmem %s1, 32
        %v659 = vld [vmem:[%s658] sm:$0xf]
        %v660 = vld [vmem:[%s658 + $0x4] sm:$0xf]
        %v661 = vld [vmem:[%s658 + $0x8] sm:$0xf]
        %v662 = vld [vmem:[%s658 + $0xc] sm:$0xf]
        %v667 = vunpack.c.l.b16 %v659
        %v668 = vunpack.c.l.b16 %v660
        %v669 = vunpack.c.l.b16 %v661
        %v670 = vunpack.c.l.b16 %v662
        %v671 = vpack.c.b16 %v668, %v667
        %v672 = vpack.c.b16 %v670, %v669
        %673 = vrot.lane.b32.xlu0 %v356, 127
        %v674 = vpop.permute.xlu0 %673
        %675 = vrot.lane.b32.xlu0 %v357, 127
        %v676 = vpop.permute.xlu0 %675
        %677 = vrot.lane.b32.xlu0 %v358, 127
        %v678 = vpop.permute.xlu0 %677
        %679 = vrot.lane.b32.xlu0 %v359, 127
        %v680 = vpop.permute.xlu0 %679
        %v686 = vsel %vm399, %v671, 0
        %v689 = vsel %vm399, %v672, 0
        %691 = vmatprep.subr.bf16.mxu0 0
        %692 = vmatpush1.bf16.msra.mxu0 %v674
        %693 = vmatprep.subr.bf16.mxu0 0
        %694 = vmatpush1.bf16.msra.mxu0 %v676
        %695 = vmatprep.subr.bf16.mxu0 0
        %696 = vmatpush1.bf16.msra.mxu0 %v678
        %697 = vmatprep.subr.bf16.mxu0 0
        %698 = vmatpush1.bf16.msra.mxu0 %v680
        %699 = vmatprep.subr.bf16.mxu0 0
        %700 = vmatpush1.bf16.msra.mxu0 0
        %701 = vmatprep.subr.bf16.mxu0 0
        %702 = vmatpush1.bf16.msra.mxu0 0
        %703 = vmatprep.subr.bf16.mxu0 0
        %704 = vmatpush1.bf16.msra.mxu0 0
        %705 = vmatprep.subr.bf16.mxu0 0
        %706 = vmatpush1.bf16.msra.mxu0 0
        %707 = vmatprep.subr.bf16.mxu0 0
        %708 = vmatpush1.bf16.msra.mxu0 0
        %709 = vmatprep.subr.bf16.mxu0 0
        %710 = vmatpush1.bf16.msra.mxu0 0
        %711 = vmatprep.subr.bf16.mxu0 0
        %712 = vmatpush1.bf16.msra.mxu0 0
        %713 = vmatprep.subr.bf16.mxu0 0
        %714 = vmatpush1.bf16.msra.mxu0 0
        %715 = vmatprep.subr.bf16.mxu0 0
        %716 = vmatpush1.bf16.msra.mxu0 0
        %717 = vmatprep.subr.bf16.mxu0 0
        %718 = vmatpush1.bf16.msra.mxu0 0
        %719 = vmatprep.subr.bf16.mxu0 0
        %720 = vmatpush1.bf16.msra.mxu0 0
        %721 = vmatprep.subr.bf16.mxu0 0
        %722 = vmatpush1.bf16.msra.mxu0 0
        %723 = vmatprep.mubr.bf16.mxu0 0
        %724 = vmatmul.mubr.bf16.gmra.mrb[0].mxu0 %v686
        %v725 = vpop.f32.mrb[0].mxu0
        %v726 = vadd.f32 0.0, %v725
        %v727 = vpop.f32.mrb[0].mxu0
        %v728 = vpop.f32.mrb[0].mxu0
        %v729 = vadd.f32 0.0, %v728
        %v730 = vpop.f32.mrb[0].mxu0
        %731 = vmatprep.mubr.bf16.mxu0 0
        %732 = vmatmul.mubr.bf16.gmra.mrb[0].mxu0 %v689
        %v733 = vpop.f32.mrb[0].mxu0
        %v734 = vadd.f32 0.0, %v733
        %v735 = vpop.f32.mrb[0].mxu0
        %v736 = vpop.f32.mrb[0].mxu0
        %v737 = vadd.f32 0.0, %v736
        %v738 = vpop.f32.mrb[0].mxu0
        %739 = vdwg.mxu0
        %740 = vrot.lane.b32.xlu0 %v360, 127
        %v741 = vpop.permute.xlu0 %740
        %742 = vrot.lane.b32.xlu0 %v361, 127
        %v743 = vpop.permute.xlu0 %742
        %744 = vrot.lane.b32.xlu0 %v362, 127
        %v745 = vpop.permute.xlu0 %744
        %746 = vrot.lane.b32.xlu0 %v363, 127
        %v747 = vpop.permute.xlu0 %746
        %752 = vmatprep.subr.bf16.mxu0 0
        %753 = vmatpush1.bf16.msra.mxu0 %v741
        %754 = vmatprep.subr.bf16.mxu0 0
        %755 = vmatpush1.bf16.msra.mxu0 %v743
        %756 = vmatprep.subr.bf16.mxu0 0
        %757 = vmatpush1.bf16.msra.mxu0 %v745
        %758 = vmatprep.subr.bf16.mxu0 0
        %759 = vmatpush1.bf16.msra.mxu0 %v747
        %760 = vmatprep.subr.bf16.mxu0 0
        %761 = vmatpush1.bf16.msra.mxu0 0
        %762 = vmatprep.subr.bf16.mxu0 0
        %763 = vmatpush1.bf16.msra.mxu0 0
        %764 = vmatprep.subr.bf16.mxu0 0
        %765 = vmatpush1.bf16.msra.mxu0 0
        %766 = vmatprep.subr.bf16.mxu0 0
        %767 = vmatpush1.bf16.msra.mxu0 0
        %768 = vmatprep.subr.bf16.mxu0 0
        %769 = vmatpush1.bf16.msra.mxu0 0
        %770 = vmatprep.subr.bf16.mxu0 0
        %771 = vmatpush1.bf16.msra.mxu0 0
        %772 = vmatprep.subr.bf16.mxu0 0
        %773 = vmatpush1.bf16.msra.mxu0 0
        %774 = vmatprep.subr.bf16.mxu0 0
        %775 = vmatpush1.bf16.msra.mxu0 0
        %776 = vmatprep.subr.bf16.mxu0 0
        %777 = vmatpush1.bf16.msra.mxu0 0
        %778 = vmatprep.subr.bf16.mxu0 0
        %779 = vmatpush1.bf16.msra.mxu0 0
        %780 = vmatprep.subr.bf16.mxu0 0
        %781 = vmatpush1.bf16.msra.mxu0 0
        %782 = vmatprep.subr.bf16.mxu0 0
        %783 = vmatpush1.bf16.msra.mxu0 0
        %784 = vmatprep.mubr.bf16.mxu0 0
        %785 = vmatmul.mubr.bf16.gmra.mrb[0].mxu0 %v686
        %v786 = vpop.f32.mrb[0].mxu0
        %v787 = vadd.f32 0.0, %v786
        %v788 = vpop.f32.mrb[0].mxu0
        %v789 = vpop.f32.mrb[0].mxu0
        %v790 = vadd.f32 0.0, %v789
        %v791 = vpop.f32.mrb[0].mxu0
        %792 = vmatprep.mubr.bf16.mxu0 0
        %793 = vmatmul.mubr.bf16.gmra.mrb[0].mxu0 %v689
        %v794 = vpop.f32.mrb[0].mxu0
        %v795 = vadd.f32 0.0, %v794
        %v796 = vpop.f32.mrb[0].mxu0
        %v797 = vpop.f32.mrb[0].mxu0
        %v798 = vadd.f32 0.0, %v797
        %v799 = vpop.f32.mrb[0].mxu0
        %800 = vdwg.mxu0
        %v801 = vadd.f32 %v583, %v726
        %v802 = vadd.f32 %v586, %v729
        %v803 = vadd.f32 %v591, %v734
        %v804 = vadd.f32 %v594, %v737
        %v805 = vadd.f32 %v644, %v787
        %v806 = vadd.f32 %v647, %v790
        %v807 = vadd.f32 %v652, %v795
        %v808 = vadd.f32 %v655, %v798
        %v809 = vld [vmem:[%s2] sm:$0xff]
        %v810 = vld [vmem:[%s2 + $0x8] sm:$0xff]
        %v811 = vld [vmem:[%s2 + $0x10] sm:$0xff]
        %v812 = vld [vmem:[%s2 + $0x18] sm:$0xff]
        %814 = vset.pattern.permute.xlu0 0
        %815 = vperm.xlu0 %814, %v809
        %v816 = vpop.permute.xlu0 %815
        %819 = vset.pattern.permute.xlu0 0
        %820 = vperm.xlu0 %819, %v810
        %v821 = vpop.permute.xlu0 %820
        %824 = vset.pattern.permute.xlu0 0
        %825 = vperm.xlu0 %824, %v811
        %v826 = vpop.permute.xlu0 %825
        %829 = vset.pattern.permute.xlu0 0
        %830 = vperm.xlu0 %829, %v812
        %v831 = vpop.permute.xlu0 %830
        %v833 = vadd.f32 %v801, %v816
        %v834 = vadd.f32 %v802, %v821
        %v835 = vadd.f32 %v803, %v826
        %v836 = vadd.f32 %v804, %v831
        %v837 = vadd.f32 %v805, %v816
        %v838 = vadd.f32 %v806, %v821
        %v839 = vadd.f32 %v807, %v826
        %v840 = vadd.f32 %v808, %v831
        %v841 = vmax.f32 %v833, 0.0
        %v842 = vmax.f32 %v834, 0.0
        %v843 = vmax.f32 %v835, 0.0
        %v844 = vmax.f32 %v836, 0.0
        %v845 = vmax.f32 %v837, 0.0
        %v846 = vmax.f32 %v838, 0.0
        %v847 = vmax.f32 %v839, 0.0
        %v848 = vmax.f32 %v840, 0.0
        %v849 = vpack.c.bf16 %v842, %v841
        %v850 = vpack.c.bf16 %v844, %v843
        %v851 = vpack.c.bf16 %v846, %v845
        %v852 = vpack.c.bf16 %v848, %v847
        %v853 = vld [vmem:[%s3] sm:$0xf]
        %v854 = vld [vmem:[%s3 + $0x4] sm:$0xf]
        %s855 = scalar_lea.vmem %s3, 8
        %v856 = vld [vmem:[%s855] sm:$0xf]
        %v857 = vld [vmem:[%s855 + $0x4] sm:$0xf]
        %v860 = vunpack.c.l.b16 %v856
        %v861 = vunpack.c.l.b16 %v857
        %v862 = vpack.c.b16 %v861, %v860
        %865 = vrot.lane.b32.xlu0 %v849, 126
        %v866 = vpop.permute.xlu0 %865
        %867 = vrot.lane.b32.xlu0 %v850, 126
        %v868 = vpop.permute.xlu0 %867
        %vm871 = vcmask 261120
        %v873 = vsel %vm871, %v862, 0
        %875 = vmatprep.subr.bf16.mxu0 0
        %876 = vmatpush1.bf16.msra.mxu0 %v866
        %877 = vmatprep.subr.bf16.mxu0 0
        %878 = vmatpush1.bf16.msra.mxu0 %v868
        %879 = vmatprep.subr.bf16.mxu0 0
        %880 = vmatpush1.bf16.msra.mxu0 0
        %881 = vmatprep.subr.bf16.mxu0 0
        %882 = vmatpush1.bf16.msra.mxu0 0
        %883 = vmatprep.subr.bf16.mxu0 0
        %884 = vmatpush1.bf16.msra.mxu0 0
        %885 = vmatprep.subr.bf16.mxu0 0
        %886 = vmatpush1.bf16.msra.mxu0 0
        %887 = vmatprep.subr.bf16.mxu0 0
        %888 = vmatpush1.bf16.msra.mxu0 0
        %889 = vmatprep.subr.bf16.mxu0 0
        %890 = vmatpush1.bf16.msra.mxu0 0
        %891 = vmatprep.subr.bf16.mxu0 0
        %892 = vmatpush1.bf16.msra.mxu0 0
        %893 = vmatprep.subr.bf16.mxu0 0
        %894 = vmatpush1.bf16.msra.mxu0 0
        %895 = vmatprep.subr.bf16.mxu0 0
        %896 = vmatpush1.bf16.msra.mxu0 0
        %897 = vmatprep.subr.bf16.mxu0 0
        %898 = vmatpush1.bf16.msra.mxu0 0
        %899 = vmatprep.subr.bf16.mxu0 0
        %900 = vmatpush1.bf16.msra.mxu0 0
        %901 = vmatprep.subr.bf16.mxu0 0
        %902 = vmatpush1.bf16.msra.mxu0 0
        %903 = vmatprep.subr.bf16.mxu0 0
        %904 = vmatpush1.bf16.msra.mxu0 0
        %905 = vmatprep.subr.bf16.mxu0 0
        %906 = vmatpush1.bf16.msra.mxu0 0
        %907 = vmatprep.mubr.bf16.mxu0 0
        %908 = vmatmul.mubr.bf16.gmra.mrb[0].mxu0 %v873
        %v909 = vpop.f32.mrb[0].mxu0
        %v910 = vadd.f32 0.0, %v909
        %v911 = vpop.f32.mrb[0].mxu0
        %v912 = vpop.f32.mrb[0].mxu0
        %v913 = vadd.f32 0.0, %v912
        %v914 = vpop.f32.mrb[0].mxu0
        %915 = vdwg.mxu0
        %918 = vrot.lane.b32.xlu0 %v851, 126
        %v919 = vpop.permute.xlu0 %918
        %920 = vrot.lane.b32.xlu0 %v852, 126
        %v921 = vpop.permute.xlu0 %920
        %924 = vmatprep.subr.bf16.mxu0 0
        %925 = vmatpush1.bf16.msra.mxu0 %v919
        %926 = vmatprep.subr.bf16.mxu0 0
        %927 = vmatpush1.bf16.msra.mxu0 %v921
        %928 = vmatprep.subr.bf16.mxu0 0
        %929 = vmatpush1.bf16.msra.mxu0 0
        %930 = vmatprep.subr.bf16.mxu0 0
        %931 = vmatpush1.bf16.msra.mxu0 0
        %932 = vmatprep.subr.bf16.mxu0 0
        %933 = vmatpush1.bf16.msra.mxu0 0
        %934 = vmatprep.subr.bf16.mxu0 0
        %935 = vmatpush1.bf16.msra.mxu0 0
        %936 = vmatprep.subr.bf16.mxu0 0
        %937 = vmatpush1.bf16.msra.mxu0 0
        %938 = vmatprep.subr.bf16.mxu0 0
        %939 = vmatpush1.bf16.msra.mxu0 0
        %940 = vmatprep.subr.bf16.mxu0 0
        %941 = vmatpush1.bf16.msra.mxu0 0
        %942 = vmatprep.subr.bf16.mxu0 0
        %943 = vmatpush1.bf16.msra.mxu0 0
        %944 = vmatprep.subr.bf16.mxu0 0
        %945 = vmatpush1.bf16.msra.mxu0 0
        %946 = vmatprep.subr.bf16.mxu0 0
        %947 = vmatpush1.bf16.msra.mxu0 0
        %948 = vmatprep.subr.bf16.mxu0 0
        %949 = vmatpush1.bf16.msra.mxu0 0
        %950 = vmatprep.subr.bf16.mxu0 0
        %951 = vmatpush1.bf16.msra.mxu0 0
        %952 = vmatprep.subr.bf16.mxu0 0
        %953 = vmatpush1.bf16.msra.mxu0 0
        %954 = vmatprep.subr.bf16.mxu0 0
        %955 = vmatpush1.bf16.msra.mxu0 0
        %956 = vmatprep.mubr.bf16.mxu0 0
        %957 = vmatmul.mubr.bf16.gmra.mrb[0].mxu0 %v873
        %v958 = vpop.f32.mrb[0].mxu0
        %v959 = vadd.f32 0.0, %v958
        %v960 = vpop.f32.mrb[0].mxu0
        %v961 = vpop.f32.mrb[0].mxu0
        %v962 = vadd.f32 0.0, %v961
        %v963 = vpop.f32.mrb[0].mxu0
        %964 = vdwg.mxu0
        %v967 = vunpack.c.l.b16 %v853
        %v968 = vunpack.c.l.b16 %v854
        %v969 = vpack.c.b16 %v968, %v967
        %970 = vrot.lane.b32.xlu0 %v849, 125
        %v971 = vpop.permute.xlu0 %970
        %972 = vrot.lane.b32.xlu0 %v850, 125
        %v973 = vpop.permute.xlu0 %972
        %v977 = vsel %vm871, %v969, 0
        %979 = vmatprep.subr.bf16.mxu0 0
        %980 = vmatpush1.bf16.msra.mxu0 %v971
        %981 = vmatprep.subr.bf16.mxu0 0
        %982 = vmatpush1.bf16.msra.mxu0 %v973
        %983 = vmatprep.subr.bf16.mxu0 0
        %984 = vmatpush1.bf16.msra.mxu0 0
        %985 = vmatprep.subr.bf16.mxu0 0
        %986 = vmatpush1.bf16.msra.mxu0 0
        %987 = vmatprep.subr.bf16.mxu0 0
        %988 = vmatpush1.bf16.msra.mxu0 0
        %989 = vmatprep.subr.bf16.mxu0 0
        %990 = vmatpush1.bf16.msra.mxu0 0
        %991 = vmatprep.subr.bf16.mxu0 0
        %992 = vmatpush1.bf16.msra.mxu0 0
        %993 = vmatprep.subr.bf16.mxu0 0
        %994 = vmatpush1.bf16.msra.mxu0 0
        %995 = vmatprep.subr.bf16.mxu0 0
        %996 = vmatpush1.bf16.msra.mxu0 0
        %997 = vmatprep.subr.bf16.mxu0 0
        %998 = vmatpush1.bf16.msra.mxu0 0
        %999 = vmatprep.subr.bf16.mxu0 0
        %1000 = vmatpush1.bf16.msra.mxu0 0
        %1001 = vmatprep.subr.bf16.mxu0 0
        %1002 = vmatpush1.bf16.msra.mxu0 0
        %1003 = vmatprep.subr.bf16.mxu0 0
        %1004 = vmatpush1.bf16.msra.mxu0 0
        %1005 = vmatprep.subr.bf16.mxu0 0
        %1006 = vmatpush1.bf16.msra.mxu0 0
        %1007 = vmatprep.subr.bf16.mxu0 0
        %1008 = vmatpush1.bf16.msra.mxu0 0
        %1009 = vmatprep.subr.bf16.mxu0 0
        %1010 = vmatpush1.bf16.msra.mxu0 0
        %1011 = vmatprep.mubr.bf16.mxu0 0
        %1012 = vmatmul.mubr.bf16.gmra.mrb[0].mxu0 %v977
        %v1013 = vpop.f32.mrb[0].mxu0
        %v1014 = vadd.f32 %v910, %v1013
        %v1015 = vpop.f32.mrb[0].mxu0
        %v1016 = vpop.f32.mrb[0].mxu0
        %v1017 = vadd.f32 %v913, %v1016
        %v1018 = vpop.f32.mrb[0].mxu0
        %1019 = vdwg.mxu0
        %1020 = vrot.lane.b32.xlu0 %v851, 125
        %v1021 = vpop.permute.xlu0 %1020
        %1022 = vrot.lane.b32.xlu0 %v852, 125
        %v1023 = vpop.permute.xlu0 %1022
        %1026 = vmatprep.subr.bf16.mxu0 0
        %1027 = vmatpush1.bf16.msra.mxu0 %v1021
        %1028 = vmatprep.subr.bf16.mxu0 0
        %1029 = vmatpush1.bf16.msra.mxu0 %v1023
        %1030 = vmatprep.subr.bf16.mxu0 0
        %1031 = vmatpush1.bf16.msra.mxu0 0
        %1032 = vmatprep.subr.bf16.mxu0 0
        %1033 = vmatpush1.bf16.msra.mxu0 0
        %1034 = vmatprep.subr.bf16.mxu0 0
        %1035 = vmatpush1.bf16.msra.mxu0 0
        %1036 = vmatprep.subr.bf16.mxu0 0
        %1037 = vmatpush1.bf16.msra.mxu0 0
        %1038 = vmatprep.subr.bf16.mxu0 0
        %1039 = vmatpush1.bf16.msra.mxu0 0
        %1040 = vmatprep.subr.bf16.mxu0 0
        %1041 = vmatpush1.bf16.msra.mxu0 0
        %1042 = vmatprep.subr.bf16.mxu0 0
        %1043 = vmatpush1.bf16.msra.mxu0 0
        %1044 = vmatprep.subr.bf16.mxu0 0
        %1045 = vmatpush1.bf16.msra.mxu0 0
        %1046 = vmatprep.subr.bf16.mxu0 0
        %1047 = vmatpush1.bf16.msra.mxu0 0
        %1048 = vmatprep.subr.bf16.mxu0 0
        %1049 = vmatpush1.bf16.msra.mxu0 0
        %1050 = vmatprep.subr.bf16.mxu0 0
        %1051 = vmatpush1.bf16.msra.mxu0 0
        %1052 = vmatprep.subr.bf16.mxu0 0
        %1053 = vmatpush1.bf16.msra.mxu0 0
        %1054 = vmatprep.subr.bf16.mxu0 0
        %1055 = vmatpush1.bf16.msra.mxu0 0
        %1056 = vmatprep.subr.bf16.mxu0 0
        %1057 = vmatpush1.bf16.msra.mxu0 0
        %1058 = vmatprep.mubr.bf16.mxu0 0
        %1059 = vmatmul.mubr.bf16.gmra.mrb[0].mxu0 %v977
        %v1060 = vpop.f32.mrb[0].mxu0
        %v1061 = vadd.f32 %v959, %v1060
        %v1062 = vpop.f32.mrb[0].mxu0
        %v1063 = vpop.f32.mrb[0].mxu0
        %v1064 = vadd.f32 %v962, %v1063
        %v1065 = vpop.f32.mrb[0].mxu0
        %1066 = vdwg.mxu0
        %s1067 = scalar_lea.vmem %s3, 16
        %v1068 = vld [vmem:[%s1067] sm:$0xf]
        %v1069 = vld [vmem:[%s1067 + $0x4] sm:$0xf]
        %v1072 = vunpack.c.l.b16 %v1068
        %v1073 = vunpack.c.l.b16 %v1069
        %v1074 = vpack.c.b16 %v1073, %v1072
        %1075 = vrot.lane.b32.xlu0 %v849, 127
        %v1076 = vpop.permute.xlu0 %1075
        %1077 = vrot.lane.b32.xlu0 %v850, 127
        %v1078 = vpop.permute.xlu0 %1077
        %v1082 = vsel %vm871, %v1074, 0
        %1084 = vmatprep.subr.bf16.mxu0 0
        %1085 = vmatpush1.bf16.msra.mxu0 %v1076
        %1086 = vmatprep.subr.bf16.mxu0 0
        %1087 = vmatpush1.bf16.msra.mxu0 %v1078
        %1088 = vmatprep.subr.bf16.mxu0 0
        %1089 = vmatpush1.bf16.msra.mxu0 0
        %1090 = vmatprep.subr.bf16.mxu0 0
        %1091 = vmatpush1.bf16.msra.mxu0 0
        %1092 = vmatprep.subr.bf16.mxu0 0
        %1093 = vmatpush1.bf16.msra.mxu0 0
        %1094 = vmatprep.subr.bf16.mxu0 0
        %1095 = vmatpush1.bf16.msra.mxu0 0
        %1096 = vmatprep.subr.bf16.mxu0 0
        %1097 = vmatpush1.bf16.msra.mxu0 0
        %1098 = vmatprep.subr.bf16.mxu0 0
        %1099 = vmatpush1.bf16.msra.mxu0 0
        %1100 = vmatprep.subr.bf16.mxu0 0
        %1101 = vmatpush1.bf16.msra.mxu0 0
        %1102 = vmatprep.subr.bf16.mxu0 0
        %1103 = vmatpush1.bf16.msra.mxu0 0
        %1104 = vmatprep.subr.bf16.mxu0 0
        %1105 = vmatpush1.bf16.msra.mxu0 0
        %1106 = vmatprep.subr.bf16.mxu0 0
        %1107 = vmatpush1.bf16.msra.mxu0 0
        %1108 = vmatprep.subr.bf16.mxu0 0
        %1109 = vmatpush1.bf16.msra.mxu0 0
        %1110 = vmatprep.subr.bf16.mxu0 0
        %1111 = vmatpush1.bf16.msra.mxu0 0
        %1112 = vmatprep.subr.bf16.mxu0 0
        %1113 = vmatpush1.bf16.msra.mxu0 0
        %1114 = vmatprep.subr.bf16.mxu0 0
        %1115 = vmatpush1.bf16.msra.mxu0 0
        %1116 = vmatprep.mubr.bf16.mxu0 0
        %1117 = vmatmul.mubr.bf16.gmra.mrb[0].mxu0 %v1082
        %v1118 = vpop.f32.mrb[0].mxu0
        %v1119 = vadd.f32 0.0, %v1118
        %v1120 = vpop.f32.mrb[0].mxu0
        %v1121 = vpop.f32.mrb[0].mxu0
        %v1122 = vadd.f32 0.0, %v1121
        %v1123 = vpop.f32.mrb[0].mxu0
        %1124 = vdwg.mxu0
        %1125 = vrot.lane.b32.xlu0 %v851, 127
        %v1126 = vpop.permute.xlu0 %1125
        %1127 = vrot.lane.b32.xlu0 %v852, 127
        %v1128 = vpop.permute.xlu0 %1127
        %1131 = vmatprep.subr.bf16.mxu0 0
        %1132 = vmatpush1.bf16.msra.mxu0 %v1126
        %1133 = vmatprep.subr.bf16.mxu0 0
        %1134 = vmatpush1.bf16.msra.mxu0 %v1128
        %1135 = vmatprep.subr.bf16.mxu0 0
        %1136 = vmatpush1.bf16.msra.mxu0 0
        %1137 = vmatprep.subr.bf16.mxu0 0
        %1138 = vmatpush1.bf16.msra.mxu0 0
        %1139 = vmatprep.subr.bf16.mxu0 0
        %1140 = vmatpush1.bf16.msra.mxu0 0
        %1141 = vmatprep.subr.bf16.mxu0 0
        %1142 = vmatpush1.bf16.msra.mxu0 0
        %1143 = vmatprep.subr.bf16.mxu0 0
        %1144 = vmatpush1.bf16.msra.mxu0 0
        %1145 = vmatprep.subr.bf16.mxu0 0
        %1146 = vmatpush1.bf16.msra.mxu0 0
        %1147 = vmatprep.subr.bf16.mxu0 0
        %1148 = vmatpush1.bf16.msra.mxu0 0
        %1149 = vmatprep.subr.bf16.mxu0 0
        %1150 = vmatpush1.bf16.msra.mxu0 0
        %1151 = vmatprep.subr.bf16.mxu0 0
        %1152 = vmatpush1.bf16.msra.mxu0 0
        %1153 = vmatprep.subr.bf16.mxu0 0
        %1154 = vmatpush1.bf16.msra.mxu0 0
        %1155 = vmatprep.subr.bf16.mxu0 0
        %1156 = vmatpush1.bf16.msra.mxu0 0
        %1157 = vmatprep.subr.bf16.mxu0 0
        %1158 = vmatpush1.bf16.msra.mxu0 0
        %1159 = vmatprep.subr.bf16.mxu0 0
        %1160 = vmatpush1.bf16.msra.mxu0 0
        %1161 = vmatprep.subr.bf16.mxu0 0
        %1162 = vmatpush1.bf16.msra.mxu0 0
        %1163 = vmatprep.mubr.bf16.mxu0 0
        %1164 = vmatmul.mubr.bf16.gmra.mrb[0].mxu0 %v1082
        %v1165 = vpop.f32.mrb[0].mxu0
        %v1166 = vadd.f32 0.0, %v1165
        %v1167 = vpop.f32.mrb[0].mxu0
        %v1168 = vpop.f32.mrb[0].mxu0
        %v1169 = vadd.f32 0.0, %v1168
        %v1170 = vpop.f32.mrb[0].mxu0
        %1171 = vdwg.mxu0
        %v1172 = vadd.f32 %v1014, %v1119
        %v1173 = vadd.f32 %v1017, %v1122
        %v1174 = vadd.f32 %v1061, %v1166
        %v1175 = vadd.f32 %v1064, %v1169
        %v1176 = vld [vmem:[%s4] sm:$0xff]
        %v1177 = vld [vmem:[%s4 + $0x8] sm:$0xff]
        %1179 = vset.pattern.permute.xlu0 0
        %1180 = vperm.xlu0 %1179, %v1176
        %v1181 = vpop.permute.xlu0 %1180
        %1184 = vset.pattern.permute.xlu0 0
        %1185 = vperm.xlu0 %1184, %v1177
        %v1186 = vpop.permute.xlu0 %1185
        %v1188 = vadd.f32 %v1172, %v1181
        %v1189 = vadd.f32 %v1173, %v1186
        %v1190 = vadd.f32 %v1174, %v1181
        %v1191 = vadd.f32 %v1175, %v1186
        %v1192 = vmax.f32 %v1188, 0.0
        %v1193 = vmax.f32 %v1189, 0.0
        %v1194 = vmax.f32 %v1190, 0.0
        %v1195 = vmax.f32 %v1191, 0.0
        %v1196 = vpack.c.bf16 %v1193, %v1192
        %v1197 = vpack.c.bf16 %v1195, %v1194
        %v1198 = vld [vmem:[%s5] sm:$0xf]
        %s1199 = scalar_lea.vmem %s5, 4
        %v1200 = vld [vmem:[%s1199] sm:$0xf]
        %1202 = vrot.lane.b32.xlu0 %v1196, 126
        %v1203 = vpop.permute.xlu0 %1202
        %vm1205 = vcmask 130048
        %v1207 = vsel %vm1205, %v1200, 0
        %1209 = vmatprep.subr.bf16.mxu0 0
        %1210 = vmatpush1.bf16.msra.mxu0 %v1203
        %1211 = vmatprep.subr.bf16.mxu0 0
        %1212 = vmatpush1.bf16.msra.mxu0 0
        %1213 = vmatprep.subr.bf16.mxu0 0
        %1214 = vmatpush1.bf16.msra.mxu0 0
        %1215 = vmatprep.subr.bf16.mxu0 0
        %1216 = vmatpush1.bf16.msra.mxu0 0
        %1217 = vmatprep.subr.bf16.mxu0 0
        %1218 = vmatpush1.bf16.msra.mxu0 0
        %1219 = vmatprep.subr.bf16.mxu0 0
        %1220 = vmatpush1.bf16.msra.mxu0 0
        %1221 = vmatprep.subr.bf16.mxu0 0
        %1222 = vmatpush1.bf16.msra.mxu0 0
        %1223 = vmatprep.subr.bf16.mxu0 0
        %1224 = vmatpush1.bf16.msra.mxu0 0
        %1225 = vmatprep.subr.bf16.mxu0 0
        %1226 = vmatpush1.bf16.msra.mxu0 0
        %1227 = vmatprep.subr.bf16.mxu0 0
        %1228 = vmatpush1.bf16.msra.mxu0 0
        %1229 = vmatprep.subr.bf16.mxu0 0
        %1230 = vmatpush1.bf16.msra.mxu0 0
        %1231 = vmatprep.subr.bf16.mxu0 0
        %1232 = vmatpush1.bf16.msra.mxu0 0
        %1233 = vmatprep.subr.bf16.mxu0 0
        %1234 = vmatpush1.bf16.msra.mxu0 0
        %1235 = vmatprep.subr.bf16.mxu0 0
        %1236 = vmatpush1.bf16.msra.mxu0 0
        %1237 = vmatprep.subr.bf16.mxu0 0
        %1238 = vmatpush1.bf16.msra.mxu0 0
        %1239 = vmatprep.subr.bf16.mxu0 0
        %1240 = vmatpush1.bf16.msra.mxu0 0
        %1241 = vmatprep.mubr.bf16.mxu0 0
        %1242 = vmatmul.mubr.bf16.gmra.mrb[0].mxu0 %v1207
        %v1243 = vpop.f32.mrb[0].mxu0
        %v1244 = vadd.f32 0.0, %v1243
        %v1245 = vpop.f32.mrb[0].mxu0
        %v1246 = vpop.f32.mrb[0].mxu0
        %v1247 = vpop.f32.mrb[0].mxu0
        %1248 = vdwg.mxu0
        %1250 = vrot.lane.b32.xlu0 %v1197, 126
        %v1251 = vpop.permute.xlu0 %1250
        %1253 = vmatprep.subr.bf16.mxu0 0
        %1254 = vmatpush1.bf16.msra.mxu0 %v1251
        %1255 = vmatprep.subr.bf16.mxu0 0
        %1256 = vmatpush1.bf16.msra.mxu0 0
        %1257 = vmatprep.subr.bf16.mxu0 0
        %1258 = vmatpush1.bf16.msra.mxu0 0
        %1259 = vmatprep.subr.bf16.mxu0 0
        %1260 = vmatpush1.bf16.msra.mxu0 0
        %1261 = vmatprep.subr.bf16.mxu0 0
        %1262 = vmatpush1.bf16.msra.mxu0 0
        %1263 = vmatprep.subr.bf16.mxu0 0
        %1264 = vmatpush1.bf16.msra.mxu0 0
        %1265 = vmatprep.subr.bf16.mxu0 0
        %1266 = vmatpush1.bf16.msra.mxu0 0
        %1267 = vmatprep.subr.bf16.mxu0 0
        %1268 = vmatpush1.bf16.msra.mxu0 0
        %1269 = vmatprep.subr.bf16.mxu0 0
        %1270 = vmatpush1.bf16.msra.mxu0 0
        %1271 = vmatprep.subr.bf16.mxu0 0
        %1272 = vmatpush1.bf16.msra.mxu0 0
        %1273 = vmatprep.subr.bf16.mxu0 0
        %1274 = vmatpush1.bf16.msra.mxu0 0
        %1275 = vmatprep.subr.bf16.mxu0 0
        %1276 = vmatpush1.bf16.msra.mxu0 0
        %1277 = vmatprep.subr.bf16.mxu0 0
        %1278 = vmatpush1.bf16.msra.mxu0 0
        %1279 = vmatprep.subr.bf16.mxu0 0
        %1280 = vmatpush1.bf16.msra.mxu0 0
        %1281 = vmatprep.subr.bf16.mxu0 0
        %1282 = vmatpush1.bf16.msra.mxu0 0
        %1283 = vmatprep.subr.bf16.mxu0 0
        %1284 = vmatpush1.bf16.msra.mxu0 0
        %1285 = vmatprep.mubr.bf16.mxu0 0
        %1286 = vmatmul.mubr.bf16.gmra.mrb[0].mxu0 %v1207
        %v1287 = vpop.f32.mrb[0].mxu0
        %v1288 = vadd.f32 0.0, %v1287
        %v1289 = vpop.f32.mrb[0].mxu0
        %v1290 = vpop.f32.mrb[0].mxu0
        %v1291 = vpop.f32.mrb[0].mxu0
        %1292 = vdwg.mxu0
        %1293 = vrot.lane.b32.xlu0 %v1196, 125
        %v1294 = vpop.permute.xlu0 %1293
        %v1297 = vsel %vm1205, %v1198, 0
        %1299 = vmatprep.subr.bf16.mxu0 0
        %1300 = vmatpush1.bf16.msra.mxu0 %v1294
        %1301 = vmatprep.subr.bf16.mxu0 0
        %1302 = vmatpush1.bf16.msra.mxu0 0
        %1303 = vmatprep.subr.bf16.mxu0 0
        %1304 = vmatpush1.bf16.msra.mxu0 0
        %1305 = vmatprep.subr.bf16.mxu0 0
        %1306 = vmatpush1.bf16.msra.mxu0 0
        %1307 = vmatprep.subr.bf16.mxu0 0
        %1308 = vmatpush1.bf16.msra.mxu0 0
        %1309 = vmatprep.subr.bf16.mxu0 0
        %1310 = vmatpush1.bf16.msra.mxu0 0
        %1311 = vmatprep.subr.bf16.mxu0 0
        %1312 = vmatpush1.bf16.msra.mxu0 0
        %1313 = vmatprep.subr.bf16.mxu0 0
        %1314 = vmatpush1.bf16.msra.mxu0 0
        %1315 = vmatprep.subr.bf16.mxu0 0
        %1316 = vmatpush1.bf16.msra.mxu0 0
        %1317 = vmatprep.subr.bf16.mxu0 0
        %1318 = vmatpush1.bf16.msra.mxu0 0
        %1319 = vmatprep.subr.bf16.mxu0 0
        %1320 = vmatpush1.bf16.msra.mxu0 0
        %1321 = vmatprep.subr.bf16.mxu0 0
        %1322 = vmatpush1.bf16.msra.mxu0 0
        %1323 = vmatprep.subr.bf16.mxu0 0
        %1324 = vmatpush1.bf16.msra.mxu0 0
        %1325 = vmatprep.subr.bf16.mxu0 0
        %1326 = vmatpush1.bf16.msra.mxu0 0
        %1327 = vmatprep.subr.bf16.mxu0 0
        %1328 = vmatpush1.bf16.msra.mxu0 0
        %1329 = vmatprep.subr.bf16.mxu0 0
        %1330 = vmatpush1.bf16.msra.mxu0 0
        %1331 = vmatprep.mubr.bf16.mxu0 0
        %1332 = vmatmul.mubr.bf16.gmra.mrb[0].mxu0 %v1297
        %v1333 = vpop.f32.mrb[0].mxu0
        %v1334 = vadd.f32 %v1244, %v1333
        %v1335 = vpop.f32.mrb[0].mxu0
        %v1336 = vpop.f32.mrb[0].mxu0
        %v1337 = vpop.f32.mrb[0].mxu0
        %1338 = vdwg.mxu0
        %1339 = vrot.lane.b32.xlu0 %v1197, 125
        %v1340 = vpop.permute.xlu0 %1339
        %1342 = vmatprep.subr.bf16.mxu0 0
        %1343 = vmatpush1.bf16.msra.mxu0 %v1340
        %1344 = vmatprep.subr.bf16.mxu0 0
        %1345 = vmatpush1.bf16.msra.mxu0 0
        %1346 = vmatprep.subr.bf16.mxu0 0
        %1347 = vmatpush1.bf16.msra.mxu0 0
        %1348 = vmatprep.subr.bf16.mxu0 0
        %1349 = vmatpush1.bf16.msra.mxu0 0
        %1350 = vmatprep.subr.bf16.mxu0 0
        %1351 = vmatpush1.bf16.msra.mxu0 0
        %1352 = vmatprep.subr.bf16.mxu0 0
        %1353 = vmatpush1.bf16.msra.mxu0 0
        %1354 = vmatprep.subr.bf16.mxu0 0
        %1355 = vmatpush1.bf16.msra.mxu0 0
        %1356 = vmatprep.subr.bf16.mxu0 0
        %1357 = vmatpush1.bf16.msra.mxu0 0
        %1358 = vmatprep.subr.bf16.mxu0 0
        %1359 = vmatpush1.bf16.msra.mxu0 0
        %1360 = vmatprep.subr.bf16.mxu0 0
        %1361 = vmatpush1.bf16.msra.mxu0 0
        %1362 = vmatprep.subr.bf16.mxu0 0
        %1363 = vmatpush1.bf16.msra.mxu0 0
        %1364 = vmatprep.subr.bf16.mxu0 0
        %1365 = vmatpush1.bf16.msra.mxu0 0
        %1366 = vmatprep.subr.bf16.mxu0 0
        %1367 = vmatpush1.bf16.msra.mxu0 0
        %1368 = vmatprep.subr.bf16.mxu0 0
        %1369 = vmatpush1.bf16.msra.mxu0 0
        %1370 = vmatprep.subr.bf16.mxu0 0
        %1371 = vmatpush1.bf16.msra.mxu0 0
        %1372 = vmatprep.subr.bf16.mxu0 0
        %1373 = vmatpush1.bf16.msra.mxu0 0
        %1374 = vmatprep.mubr.bf16.mxu0 0
        %1375 = vmatmul.mubr.bf16.gmra.mrb[0].mxu0 %v1297
        %v1376 = vpop.f32.mrb[0].mxu0
        %v1377 = vadd.f32 %v1288, %v1376
        %v1378 = vpop.f32.mrb[0].mxu0
        %v1379 = vpop.f32.mrb[0].mxu0
        %v1380 = vpop.f32.mrb[0].mxu0
        %1381 = vdwg.mxu0
        %s1382 = scalar_lea.vmem %s5, 8
        %v1383 = vld [vmem:[%s1382] sm:$0xf]
        %1384 = vrot.lane.b32.xlu0 %v1196, 127
        %v1385 = vpop.permute.xlu0 %1384
        %v1388 = vsel %vm1205, %v1383, 0
        %1390 = vmatprep.subr.bf16.mxu0 0
        %1391 = vmatpush1.bf16.msra.mxu0 %v1385
        %1392 = vmatprep.subr.bf16.mxu0 0
        %1393 = vmatpush1.bf16.msra.mxu0 0
        %1394 = vmatprep.subr.bf16.mxu0 0
        %1395 = vmatpush1.bf16.msra.mxu0 0
        %1396 = vmatprep.subr.bf16.mxu0 0
        %1397 = vmatpush1.bf16.msra.mxu0 0
        %1398 = vmatprep.subr.bf16.mxu0 0
        %1399 = vmatpush1.bf16.msra.mxu0 0
        %1400 = vmatprep.subr.bf16.mxu0 0
        %1401 = vmatpush1.bf16.msra.mxu0 0
        %1402 = vmatprep.subr.bf16.mxu0 0
        %1403 = vmatpush1.bf16.msra.mxu0 0
        %1404 = vmatprep.subr.bf16.mxu0 0
        %1405 = vmatpush1.bf16.msra.mxu0 0
        %1406 = vmatprep.subr.bf16.mxu0 0
        %1407 = vmatpush1.bf16.msra.mxu0 0
        %1408 = vmatprep.subr.bf16.mxu0 0
        %1409 = vmatpush1.bf16.msra.mxu0 0
        %1410 = vmatprep.subr.bf16.mxu0 0
        %1411 = vmatpush1.bf16.msra.mxu0 0
        %1412 = vmatprep.subr.bf16.mxu0 0
        %1413 = vmatpush1.bf16.msra.mxu0 0
        %1414 = vmatprep.subr.bf16.mxu0 0
        %1415 = vmatpush1.bf16.msra.mxu0 0
        %1416 = vmatprep.subr.bf16.mxu0 0
        %1417 = vmatpush1.bf16.msra.mxu0 0
        %1418 = vmatprep.subr.bf16.mxu0 0
        %1419 = vmatpush1.bf16.msra.mxu0 0
        %1420 = vmatprep.subr.bf16.mxu0 0
        %1421 = vmatpush1.bf16.msra.mxu0 0
        %1422 = vmatprep.mubr.bf16.mxu0 0
        %1423 = vmatmul.mubr.bf16.gmra.mrb[0].mxu0 %v1388
        %v1424 = vpop.f32.mrb[0].mxu0
        %v1425 = vadd.f32 0.0, %v1424
        %v1426 = vpop.f32.mrb[0].mxu0
        %v1427 = vpop.f32.mrb[0].mxu0
        %v1428 = vpop.f32.mrb[0].mxu0
        %1429 = vdwg.mxu0
        %1430 = vrot.lane.b32.xlu0 %v1197, 127
        %v1431 = vpop.permute.xlu0 %1430
        %1433 = vmatprep.subr.bf16.mxu0 0
        %1434 = vmatpush1.bf16.msra.mxu0 %v1431
        %1435 = vmatprep.subr.bf16.mxu0 0
        %1436 = vmatpush1.bf16.msra.mxu0 0
        %1437 = vmatprep.subr.bf16.mxu0 0
        %1438 = vmatpush1.bf16.msra.mxu0 0
        %1439 = vmatprep.subr.bf16.mxu0 0
        %1440 = vmatpush1.bf16.msra.mxu0 0
        %1441 = vmatprep.subr.bf16.mxu0 0
        %1442 = vmatpush1.bf16.msra.mxu0 0
        %1443 = vmatprep.subr.bf16.mxu0 0
        %1444 = vmatpush1.bf16.msra.mxu0 0
        %1445 = vmatprep.subr.bf16.mxu0 0
        %1446 = vmatpush1.bf16.msra.mxu0 0
        %1447 = vmatprep.subr.bf16.mxu0 0
        %1448 = vmatpush1.bf16.msra.mxu0 0
        %1449 = vmatprep.subr.bf16.mxu0 0
        %1450 = vmatpush1.bf16.msra.mxu0 0
        %1451 = vmatprep.subr.bf16.mxu0 0
        %1452 = vmatpush1.bf16.msra.mxu0 0
        %1453 = vmatprep.subr.bf16.mxu0 0
        %1454 = vmatpush1.bf16.msra.mxu0 0
        %1455 = vmatprep.subr.bf16.mxu0 0
        %1456 = vmatpush1.bf16.msra.mxu0 0
        %1457 = vmatprep.subr.bf16.mxu0 0
        %1458 = vmatpush1.bf16.msra.mxu0 0
        %1459 = vmatprep.subr.bf16.mxu0 0
        %1460 = vmatpush1.bf16.msra.mxu0 0
        %1461 = vmatprep.subr.bf16.mxu0 0
        %1462 = vmatpush1.bf16.msra.mxu0 0
        %1463 = vmatprep.subr.bf16.mxu0 0
        %1464 = vmatpush1.bf16.msra.mxu0 0
        %1465 = vmatprep.mubr.bf16.mxu0 0
        %1466 = vmatmul.mubr.bf16.gmra.mrb[0].mxu0 %v1388
        %v1467 = vpop.f32.mrb[0].mxu0
        %v1468 = vadd.f32 0.0, %v1467
        %v1469 = vpop.f32.mrb[0].mxu0
        %v1470 = vpop.f32.mrb[0].mxu0
        %v1471 = vpop.f32.mrb[0].mxu0
        %1472 = vdwg.mxu0
        %v1473 = vadd.f32 %v1334, %v1425
        %v1474 = vadd.f32 %v1377, %v1468
        %v1475 = vld [vmem:[%s6] sm:$0xff]
        %1477 = vset.pattern.permute.xlu0 0
        %1478 = vperm.xlu0 %1477, %v1475
        %v1479 = vpop.permute.xlu0 %1478
        %v1481 = vadd.f32 %v1473, %v1479
        %v1482 = vadd.f32 %v1474, %v1479
        %v1483 = vmax.f32 %v1481, 0.0
        %v1484 = vmax.f32 %v1482, 0.0
        %v1485 = vld [vmem:[%s7] sm:$0xff]
        %1487 = vset.pattern.permute.xlu0 0
        %1488 = vperm.xlu0 %1487, %v1485
        %v1489 = vpop.permute.xlu0 %1488
        %v1491 = vmul.f32 %v1483, %v1489
        %v1492 = vmul.f32 %v1484, %v1489
        %vm1493 = vcmask 154648
        %v1494 = vsel %vm1493, %v1491, 0.0
        %v1495 = vrot.slane %v1494, 4
        %v1496 = vadd.f32 %v1494, %v1495
        %v1497 = vrot.slane %v1496, 2
        %v1498 = vadd.f32 %v1496, %v1497
        %v1499 = vrot.slane %v1498, 1
        %v1500 = vadd.f32 %v1498, %v1499
        %v1501 = vsel %vm1493, %v1492, 0.0
        %v1502 = vrot.slane %v1501, 4
        %v1503 = vadd.f32 %v1501, %v1502
        %v1504 = vrot.slane %v1503, 2
        %v1505 = vadd.f32 %v1503, %v1504
        %v1506 = vrot.slane %v1505, 1
        %v1507 = vadd.f32 %v1505, %v1506
        %s1508 = scalar_lea.vmem %s7, 8
        %v1509 = vld [vmem:[%s1508] sm:$0xff]
        %1511 = vset.pattern.permute.xlu0 0
        %1512 = vperm.xlu0 %1511, %v1509
        %v1513 = vpop.permute.xlu0 %1512
        %v1515 = vmul.f32 %v1483, %v1513
        %v1516 = vmul.f32 %v1484, %v1513
        %vm1517 = vcmask 146448
        %v1518 = vsel %vm1517, %v1515, 0.0
        %v1519 = vrot.slane %v1518, 4
        %v1520 = vadd.f32 %v1518, %v1519
        %v1521 = vrot.slane %v1520, 2
        %v1522 = vadd.f32 %v1520, %v1521
        %v1523 = vrot.slane %v1522, 1
        %v1524 = vadd.f32 %v1522, %v1523
        %v1525 = vsel %vm1517, %v1516, 0.0
        %v1526 = vrot.slane %v1525, 4
        %v1527 = vadd.f32 %v1525, %v1526
        %v1528 = vrot.slane %v1527, 2
        %v1529 = vadd.f32 %v1527, %v1528
        %v1530 = vrot.slane %v1529, 1
        %v1531 = vadd.f32 %v1529, %v1530
        %1534 = vrot.lane.b32.xlu0 %v1524, 1
        %v1535 = vpop.permute.xlu0 %1534
        %1536 = vrot.lane.b32.xlu0 %v1531, 1
        %v1537 = vpop.permute.xlu0 %1536
        %v1540 = vadd.f32 %v1500, %v1535
        %v1541 = vadd.f32 %v1507, %v1537
        %s1542 = scalar_lea.vmem %s7, 16
        %v1543 = vld [vmem:[%s1542] sm:$0xff]
        %1545 = vset.pattern.permute.xlu0 0
        %1546 = vperm.xlu0 %1545, %v1543
        %v1547 = vpop.permute.xlu0 %1546
        %v1549 = vmul.f32 %v1483, %v1547
        %v1550 = vmul.f32 %v1484, %v1547
        %vm1551 = vcmask 138248
        %v1552 = vsel %vm1551, %v1549, 0.0
        %v1553 = vrot.slane %v1552, 4
        %v1554 = vadd.f32 %v1552, %v1553
        %v1555 = vrot.slane %v1554, 2
        %v1556 = vadd.f32 %v1554, %v1555
        %v1557 = vrot.slane %v1556, 1
        %v1558 = vadd.f32 %v1556, %v1557
        %v1559 = vsel %vm1551, %v1550, 0.0
        %v1560 = vrot.slane %v1559, 4
        %v1561 = vadd.f32 %v1559, %v1560
        %v1562 = vrot.slane %v1561, 2
        %v1563 = vadd.f32 %v1561, %v1562
        %v1564 = vrot.slane %v1563, 1
        %v1565 = vadd.f32 %v1563, %v1564
        %1568 = vrot.lane.b32.xlu0 %v1558, 2
        %v1569 = vpop.permute.xlu0 %1568
        %1570 = vrot.lane.b32.xlu0 %v1565, 2
        %v1571 = vpop.permute.xlu0 %1570
        %v1574 = vadd.f32 %v1540, %v1569
        %v1575 = vadd.f32 %v1541, %v1571
        %v1576 = vld [vmem:[#allocation2] sm:$0x1]
        %1578 = vset.pattern.permute.xlu0 0
        %1579 = vperm.xlu0 %1578, %v1576
        %v1580 = vpop.permute.xlu0 %1579
        %v1582 = vlaneseq
        %v1583 = vshrl.u32 %v1582, 7
        %v1584 = vsub.s32 0, %v1583
        %v1585 = vrot.slane %v1580, %v1584
        %v1586 = vadd.f32 %v1574, %v1585
        %v1587 = vadd.f32 %v1575, %v1585
        %1590 = vrot.lane.b32.xlu0 %v1586, 125
        %v1591 = vpop.permute.xlu0 %1590
        %1592 = vrot.lane.b32.xlu0 %v1587, 125
        %v1593 = vpop.permute.xlu0 %1592
        %vm1596 = vcmask 122880
        %1597 = vst.msk [vmem:[%s330] sm:$0x1] %vm1596, %v1591
        %1598 = vst.msk [vmem:[%s330 + $0x1] sm:$0x1] %vm1596, %v1593
        %s1599 = sand.u32 %s227, 1
        %s1600 = scalar_lea.sflag [#allocation4], %s1599
        %s1601 = sand.u32 %s227, 1
        %s1602 = smul.addr %s1601, 2
        %s1603 = scalar_lea.vmem [#allocation3], %s1602
        // Predicated region
        $region57: #{cnn_decoder_forward.1} parent=55 // pred_check
          %p1604 = pneg %p237
        $region58: #{cnn_decoder_forward.1} parent=55 // pred_check_branch
          %1606 = sbr.rel (%p1604) target = $region60
        $region59: #{cnn_decoder_forward.1} parent=55 // pred_region
          %s1607 = smul.u32 2, %s25
          %s1609 = ssub.s32 32, 32
          %1610 = vsyncadd %s1600, %s1609
          %s1611 = smul.addr %s1607, 16
          %s1612 = scalar_lea.hbm %s9, %s1611
          %s1613 = sshll.u32 %s1603, 4
          %s1614 = int_to_ptr.vmem [resolvable:$true] %s1613
          %1619 = dma.vmem_to_hbm [thread:$0]  %s1614, 32, %s1612, %s1600, 16, 16, 1
        $region60: #{cnn_decoder_forward.1} parent=55 // pred_fallthru
          _
      $region56: #{cnn_decoder_forward.1} parent=5 // pred_fallthru
        _
      %p1620 = scmp.le.s32.totalorder 2, %s20
      // Predicated region
      $region61: #{cnn_decoder_forward.1} parent=5 // pred_check
        %p1621 = pneg %p1620
      $region62: #{cnn_decoder_forward.1} parent=5 // pred_check_branch
        %1623 = sbr.rel (%p1621) target = $region64
      $region63: #{cnn_decoder_forward.1} parent=5 // pred_region
        %s1624 = ssub.s32 %s20, 2
        // Predicated region
        $region65: #{cnn_decoder_forward.1} parent=63 // pred_check
          %p1625 = pneg %p243
        $region66: #{cnn_decoder_forward.1} parent=63 // pred_check_branch
          %1627 = sbr.rel (%p1625) target = $region68
        $region67: #{cnn_decoder_forward.1} parent=63 // pred_region
          %s1628 = sand.u32 %s228, 1
          %s1629 = scalar_lea.sflag [#allocation4], %s1628
          %s1630 = sand.u32 %s228, 1
          %s1631 = smul.addr %s1630, 2
          %s1632 = scalar_lea.vmem [#allocation3], %s1631
          %1633 = dma.done %s1629, 32
        $region68: #{cnn_decoder_forward.1} parent=63 // pred_fallthru
          _
      $region64: #{cnn_decoder_forward.1} parent=5 // pred_fallthru
        _
    $region6: #{cnn_decoder_forward.1} parent=1 // loop_footer
      %s24 = sadd.s32 1, %s20
    $region7: #{cnn_decoder_forward.1} parent=1 // loop_footer_branch
      %19 = sbr.rel target = $region3
    $region8: #{cnn_decoder_forward.1} parent=1 // loop_exit
      _
    %1634 = vsyncpa [#allocation4], 1
    %s1635 = scalar_lea.sflag [#allocation4], 1
    %1636 = vsyncpa %s1635, 1

</llo_original>
